<compile_context>
chip_gen: v7x
topology: tpu7x:2x2x1
jax: 0.10.0
libtpu: 0.0.40
codegen_flags: <defaults>
</compile_context>

<pallas_src>
import functools

import jax
import jax.numpy as jnp
from jax.experimental import pallas as pl
from jax.experimental.pallas import tpu as pltpu


def _dwconv_kernel(x_ref, w_ref, b_ref, out_ref, xpad_ref, *, k):
    """Depthwise KxK conv with 'same' padding + bias, one batch image per step.

    Block shapes:
      x_ref    : (1, H, W, C)      input tile (NHWC)
      w_ref    : (K*K, C)          depthwise weights, tap-major, channels in lanes
      b_ref    : (1, C)            bias
      out_ref  : (1, H, W, C)
      xpad_ref : (H+2p, W+2p, C)   VMEM scratch (zero halo + copied interior)
    """
    _, H, W, C = x_ref.shape
    pad = k // 2
    Hp, Wp = H + 2 * pad, W + 2 * pad

    # Zero only the halo ring; the interior is fully overwritten below.  Done
    # every grid step (not gated on program_id==0) so it remains correct when
    # the "parallel" batch axis is sharded across TensorCores (v7x).
    xpad_ref[0:pad, :, :] = jnp.zeros((pad, Wp, C), jnp.float32)
    xpad_ref[Hp - pad:Hp, :, :] = jnp.zeros((pad, Wp, C), jnp.float32)
    xpad_ref[pad:pad + H, 0:pad, :] = jnp.zeros((H, pad, C), jnp.float32)
    xpad_ref[pad:pad + H, Wp - pad:Wp, :] = jnp.zeros((H, pad, C), jnp.float32)

    # Copy the input into the interior of the padded scratch (in-kernel padding:
    # no wrapper jnp.pad, no duplicate HBM array, no extra DMA traffic).
    xpad_ref[pad:pad + H, pad:pad + W, :] = x_ref[0]

    # Load all taps' weights once.
    wts = w_ref[...]          # (K*K, C)
    bias = b_ref[0, :].reshape(1, 1, C)

    # K*K taps: pure VPU broadcast-FMA over the lane-dense (H, W, C) tile.
    acc = jnp.zeros((H, W, C), jnp.float32)
    for kh in range(k):
        for kw in range(k):
            win = xpad_ref[kh:kh + H, kw:kw + W, :]
            wk = wts[kh * k + kw].reshape(1, 1, C)
            acc = acc + win * wk

    out_ref[0] = (acc + bias).astype(out_ref.dtype)


def dwconv_forward(x_bnc, weight, bias, H, W):
    """DWConv.forward.

    x_bnc  : (B, N, C) with N == H * W
    weight : (C, 1, K, K)   PyTorch depthwise Conv2d weight (groups=C)
    bias   : (C,)
    returns (B, N, C)
    """
    B, N, C = x_bnc.shape
    assert N == H * W
    K = weight.shape[-1]
    pad = K // 2

    # (B, N, C) row-major == NHWC (B, H, W, C): free reshape, no transpose.
    x = x_bnc.reshape(B, H, W, C).astype(jnp.float32)
    # (C, 1, K, K) -> (K, K, C) -> (K*K, C): channels in the lane dimension.
    w = jnp.transpose(weight[:, 0, :, :], (1, 2, 0)).reshape(K * K, C)
    w = w.astype(jnp.float32)
    b = bias.reshape(1, C).astype(jnp.float32)

    kernel = functools.partial(_dwconv_kernel, k=K)

    out = pl.pallas_call(
        kernel,
        out_shape=jax.ShapeDtypeStruct((B, H, W, C), jnp.float32),
        grid_spec=pltpu.PrefetchScalarGridSpec(
            num_scalar_prefetch=0,
            grid=(B,),
            in_specs=[
                pl.BlockSpec((1, H, W, C), lambda i: (i, 0, 0, 0)),   # x
                pl.BlockSpec((K * K, C), lambda i: (0, 0)),           # weights
                pl.BlockSpec((1, C), lambda i: (0, 0)),               # bias
            ],
            out_specs=pl.BlockSpec((1, H, W, C), lambda i: (i, 0, 0, 0)),
            scratch_shapes=[
                pltpu.VMEM((H + 2 * pad, W + 2 * pad, C), jnp.float32),
            ],
        ),
        compiler_params=pltpu.CompilerParams(
            dimension_semantics=("parallel",)),
    )(x, w, b)

    return out.reshape(B, N, C)


def _reference(x_bnc, weight, bias, H, W):
    """Pure-JAX reference matching PyTorch's depthwise Conv2d semantics."""
    B, N, C = x_bnc.shape
    x = jnp.transpose(x_bnc, (0, 2, 1)).reshape(B, C, H, W)
    dn = jax.lax.conv_dimension_numbers(x.shape, weight.shape,
                                        ("NCHW", "OIHW", "NCHW"))
    pad = weight.shape[-1] // 2
    y = jax.lax.conv_general_dilated(x, weight, (1, 1),
                                     [(pad, pad), (pad, pad)],
                                     dimension_numbers=dn,
                                     feature_group_count=C)
    y = y + bias[None, :, None, None]
    return jnp.transpose(y.reshape(B, C, N), (0, 2, 1))


if __name__ == "__main__":
    # Small shapes consistent with DWConv(dim=128) on a 16x16 token grid.
    B, C, H, W, K = 2, 128, 16, 16, 3
    N = H * W

    key = jax.random.PRNGKey(0)
    kx, kwt, kb = jax.random.split(key, 3)

    fan_in = K * K  # depthwise: in_channels per group = 1
    std = 1.0 / (fan_in ** 0.5)
    x = jax.random.normal(kx, (B, N, C), jnp.float32)
    weight = jax.random.normal(kwt, (C, 1, K, K), jnp.float32) * std
    bias = jax.random.normal(kb, (C,), jnp.float32) * std

    out = dwconv_forward(x, weight, bias, H, W)
    out = jax.block_until_ready(out)

    ref = _reference(x, weight, bias, H, W)
    assert out.shape == (B, N, C)
    assert jnp.allclose(out, ref, rtol=1e-3, atol=1e-3), "mismatch vs reference"

    print("KERNEL_OK")
</pallas_src>

<mosaic_0001>
module attributes {stable_mosaic.version = 11 : i64} {
  func.func @_dwconv_kernel(%arg0: i32, %arg1: memref<1x16x16x128xf32, #tpu.memory_space<vmem>>, %arg2: memref<9x128xf32, #tpu.memory_space<vmem>>, %arg3: memref<1x128xf32, #tpu.memory_space<vmem>>, %arg4: memref<1x16x16x128xf32, #tpu.memory_space<vmem>>, %arg5: memref<18x18x128xf32, #tpu.memory_space<vmem>>) attributes {dimension_semantics = [#tpu.dimension_semantics<parallel>], iteration_bounds = array<i64: 2>, scalar_prefetch = 0 : i64, scratch_operands = 1 : i64, tpu.core_type = #tpu.core_type<tc>, window_params = [{transform_indices = @transform_0, window_bounds = array<i64: 1, 16, 16, 128>}, {pipeline_mode = #tpu.pipeline_mode<synchronous>, transform_indices = @transform_1, window_bounds = array<i64: 9, 128>}, {pipeline_mode = #tpu.pipeline_mode<synchronous>, transform_indices = @transform_2, window_bounds = array<i64: 1, 128>}, {transform_indices = @transform_3, window_bounds = array<i64: 1, 16, 16, 128>}]} {
    %cst = arith.constant 0.000000e+00 : f32
    %0 = vector.broadcast %cst : f32 to vector<1x18x128xf32>
    %c0 = arith.constant 0 : index
    %c0_0 = arith.constant 0 : index
    %c0_1 = arith.constant 0 : index
    %1 = vector.load %arg5[%c0, %c0_0, %c0_1] : memref<18x18x128xf32, #tpu.memory_space<vmem>>, vector<1x18x128xf32>
    tpu.vector_store %arg5[%c0, %c0_0, %c0_1], %0 {strides = array<i32>} : memref<18x18x128xf32, #tpu.memory_space<vmem>>, vector<1x18x128xf32>,
    %cst_2 = arith.constant 0.000000e+00 : f32
    %2 = vector.broadcast %cst_2 : f32 to vector<1x18x128xf32>
    %c17 = arith.constant 17 : index
    %c0_3 = arith.constant 0 : index
    %c0_4 = arith.constant 0 : index
    %3 = vector.load %arg5[%c17, %c0_3, %c0_4] : memref<18x18x128xf32, #tpu.memory_space<vmem>>, vector<1x18x128xf32>
    tpu.vector_store %arg5[%c17, %c0_3, %c0_4], %2 {strides = array<i32>} : memref<18x18x128xf32, #tpu.memory_space<vmem>>, vector<1x18x128xf32>,
    %cst_5 = arith.constant 0.000000e+00 : f32
    %4 = vector.broadcast %cst_5 : f32 to vector<16x1x128xf32>
    %c1 = arith.constant 1 : index
    %c0_6 = arith.constant 0 : index
    %c0_7 = arith.constant 0 : index
    %5 = vector.load %arg5[%c1, %c0_6, %c0_7] : memref<18x18x128xf32, #tpu.memory_space<vmem>>, vector<16x1x128xf32>
    tpu.vector_store %arg5[%c1, %c0_6, %c0_7], %4 {strides = array<i32>} : memref<18x18x128xf32, #tpu.memory_space<vmem>>, vector<16x1x128xf32>,
    %cst_8 = arith.constant 0.000000e+00 : f32
    %6 = vector.broadcast %cst_8 : f32 to vector<16x1x128xf32>
    %c1_9 = arith.constant 1 : index
    %c17_10 = arith.constant 17 : index
    %c0_11 = arith.constant 0 : index
    %7 = vector.load %arg5[%c1_9, %c17_10, %c0_11] : memref<18x18x128xf32, #tpu.memory_space<vmem>>, vector<16x1x128xf32>
    tpu.vector_store %arg5[%c1_9, %c17_10, %c0_11], %6 {strides = array<i32>} : memref<18x18x128xf32, #tpu.memory_space<vmem>>, vector<16x1x128xf32>,
    %c0_12 = arith.constant 0 : index
    %c0_13 = arith.constant 0 : index
    %c0_14 = arith.constant 0 : index
    %c0_15 = arith.constant 0 : index
    %8 = vector.load %arg1[%c0_12, %c0_13, %c0_14, %c0_15] : memref<1x16x16x128xf32, #tpu.memory_space<vmem>>, vector<1x16x16x128xf32>
    %9 = vector.shape_cast %8 : vector<1x16x16x128xf32> to vector<16x16x128xf32>
    %c1_16 = arith.constant 1 : index
    %c1_17 = arith.constant 1 : index
    %c0_18 = arith.constant 0 : index
    %10 = vector.load %arg5[%c1_16, %c1_17, %c0_18] : memref<18x18x128xf32, #tpu.memory_space<vmem>>, vector<16x16x128xf32>
    tpu.vector_store %arg5[%c1_16, %c1_17, %c0_18], %9 {strides = array<i32>} : memref<18x18x128xf32, #tpu.memory_space<vmem>>, vector<16x16x128xf32>,
    %c0_19 = arith.constant 0 : index
    %c0_20 = arith.constant 0 : index
    %11 = vector.load %arg2[%c0_19, %c0_20] : memref<9x128xf32, #tpu.memory_space<vmem>>, vector<9x128xf32>
    %c0_21 = arith.constant 0 : index
    %c0_22 = arith.constant 0 : index
    %12 = vector.load %arg3[%c0_21, %c0_22] : memref<1x128xf32, #tpu.memory_space<vmem>>, vector<1x128xf32>
    %13 = vector.shape_cast %12 : vector<1x128xf32> to vector<128xf32>
    %14 = vector.shape_cast %13 : vector<128xf32> to vector<1x1x128xf32>
    %cst_23 = arith.constant 0.000000e+00 : f32
    %15 = vector.broadcast %cst_23 : f32 to vector<16x16x128xf32>
    %c0_24 = arith.constant 0 : index
    %c0_25 = arith.constant 0 : index
    %c0_26 = arith.constant 0 : index
    %16 = vector.load %arg5[%c0_24, %c0_25, %c0_26] : memref<18x18x128xf32, #tpu.memory_space<vmem>>, vector<16x16x128xf32>
    %17 = vector.extract_strided_slice %11 {offsets = [0, 0], sizes = [1, 128], strides = [1, 1]} : vector<9x128xf32> to vector<1x128xf32>
    %18 = vector.shape_cast %17 : vector<1x128xf32> to vector<128xf32>
    %19 = vector.shape_cast %18 : vector<128xf32> to vector<1x1x128xf32>
    %20 = vector.broadcast %19 : vector<1x1x128xf32> to vector<16x16x128xf32>
    %21 = arith.mulf %16, %20 : vector<16x16x128xf32>
    %22 = arith.addf %15, %21 : vector<16x16x128xf32>
    %c0_27 = arith.constant 0 : index
    %c1_28 = arith.constant 1 : index
    %c0_29 = arith.constant 0 : index
    %23 = vector.load %arg5[%c0_27, %c1_28, %c0_29] : memref<18x18x128xf32, #tpu.memory_space<vmem>>, vector<16x16x128xf32>
    %24 = vector.extract_strided_slice %11 {offsets = [1, 0], sizes = [1, 128], strides = [1, 1]} : vector<9x128xf32> to vector<1x128xf32>
    %25 = vector.shape_cast %24 : vector<1x128xf32> to vector<128xf32>
    %26 = vector.shape_cast %25 : vector<128xf32> to vector<1x1x128xf32>
    %27 = vector.broadcast %26 : vector<1x1x128xf32> to vector<16x16x128xf32>
    %28 = arith.mulf %23, %27 : vector<16x16x128xf32>
    %29 = arith.addf %22, %28 : vector<16x16x128xf32>
    %c0_30 = arith.constant 0 : index
    %c2 = arith.constant 2 : index
    %c0_31 = arith.constant 0 : index
    %30 = vector.load %arg5[%c0_30, %c2, %c0_31] : memref<18x18x128xf32, #tpu.memory_space<vmem>>, vector<16x16x128xf32>
    %31 = vector.extract_strided_slice %11 {offsets = [2, 0], sizes = [1, 128], strides = [1, 1]} : vector<9x128xf32> to vector<1x128xf32>
    %32 = vector.shape_cast %31 : vector<1x128xf32> to vector<128xf32>
    %33 = vector.shape_cast %32 : vector<128xf32> to vector<1x1x128xf32>
    %34 = vector.broadcast %33 : vector<1x1x128xf32> to vector<16x16x128xf32>
    %35 = arith.mulf %30, %34 : vector<16x16x128xf32>
    %36 = arith.addf %29, %35 : vector<16x16x128xf32>
    %c1_32 = arith.constant 1 : index
    %c0_33 = arith.constant 0 : index
    %c0_34 = arith.constant 0 : index
    %37 = vector.load %arg5[%c1_32, %c0_33, %c0_34] : memref<18x18x128xf32, #tpu.memory_space<vmem>>, vector<16x16x128xf32>
    %38 = vector.extract_strided_slice %11 {offsets = [3, 0], sizes = [1, 128], strides = [1, 1]} : vector<9x128xf32> to vector<1x128xf32>
    %39 = vector.shape_cast %38 : vector<1x128xf32> to vector<128xf32>
    %40 = vector.shape_cast %39 : vector<128xf32> to vector<1x1x128xf32>
    %41 = vector.broadcast %40 : vector<1x1x128xf32> to vector<16x16x128xf32>
    %42 = arith.mulf %37, %41 : vector<16x16x128xf32>
    %43 = arith.addf %36, %42 : vector<16x16x128xf32>
    %c1_35 = arith.constant 1 : index
    %c1_36 = arith.constant 1 : index
    %c0_37 = arith.constant 0 : index
    %44 = vector.load %arg5[%c1_35, %c1_36, %c0_37] : memref<18x18x128xf32, #tpu.memory_space<vmem>>, vector<16x16x128xf32>
    %45 = vector.extract_strided_slice %11 {offsets = [4, 0], sizes = [1, 128], strides = [1, 1]} : vector<9x128xf32> to vector<1x128xf32>
    %46 = vector.shape_cast %45 : vector<1x128xf32> to vector<128xf32>
    %47 = vector.shape_cast %46 : vector<128xf32> to vector<1x1x128xf32>
    %48 = vector.broadcast %47 : vector<1x1x128xf32> to vector<16x16x128xf32>
    %49 = arith.mulf %44, %48 : vector<16x16x128xf32>
    %50 = arith.addf %43, %49 : vector<16x16x128xf32>
    %c1_38 = arith.constant 1 : index
    %c2_39 = arith.constant 2 : index
    %c0_40 = arith.constant 0 : index
    %51 = vector.load %arg5[%c1_38, %c2_39, %c0_40] : memref<18x18x128xf32, #tpu.memory_space<vmem>>, vector<16x16x128xf32>
    %52 = vector.extract_strided_slice %11 {offsets = [5, 0], sizes = [1, 128], strides = [1, 1]} : vector<9x128xf32> to vector<1x128xf32>
    %53 = vector.shape_cast %52 : vector<1x128xf32> to vector<128xf32>
    %54 = vector.shape_cast %53 : vector<128xf32> to vector<1x1x128xf32>
    %55 = vector.broadcast %54 : vector<1x1x128xf32> to vector<16x16x128xf32>
    %56 = arith.mulf %51, %55 : vector<16x16x128xf32>
    %57 = arith.addf %50, %56 : vector<16x16x128xf32>
    %c2_41 = arith.constant 2 : index
    %c0_42 = arith.constant 0 : index
    %c0_43 = arith.constant 0 : index
    %58 = vector.load %arg5[%c2_41, %c0_42, %c0_43] : memref<18x18x128xf32, #tpu.memory_space<vmem>>, vector<16x16x128xf32>
    %59 = vector.extract_strided_slice %11 {offsets = [6, 0], sizes = [1, 128], strides = [1, 1]} : vector<9x128xf32> to vector<1x128xf32>
    %60 = vector.shape_cast %59 : vector<1x128xf32> to vector<128xf32>
    %61 = vector.shape_cast %60 : vector<128xf32> to vector<1x1x128xf32>
    %62 = vector.broadcast %61 : vector<1x1x128xf32> to vector<16x16x128xf32>
    %63 = arith.mulf %58, %62 : vector<16x16x128xf32>
    %64 = arith.addf %57, %63 : vector<16x16x128xf32>
    %c2_44 = arith.constant 2 : index
    %c1_45 = arith.constant 1 : index
    %c0_46 = arith.constant 0 : index
    %65 = vector.load %arg5[%c2_44, %c1_45, %c0_46] : memref<18x18x128xf32, #tpu.memory_space<vmem>>, vector<16x16x128xf32>
    %66 = vector.extract_strided_slice %11 {offsets = [7, 0], sizes = [1, 128], strides = [1, 1]} : vector<9x128xf32> to vector<1x128xf32>
    %67 = vector.shape_cast %66 : vector<1x128xf32> to vector<128xf32>
    %68 = vector.shape_cast %67 : vector<128xf32> to vector<1x1x128xf32>
    %69 = vector.broadcast %68 : vector<1x1x128xf32> to vector<16x16x128xf32>
    %70 = arith.mulf %65, %69 : vector<16x16x128xf32>
    %71 = arith.addf %64, %70 : vector<16x16x128xf32>
    %c2_47 = arith.constant 2 : index
    %c2_48 = arith.constant 2 : index
    %c0_49 = arith.constant 0 : index
    %72 = vector.load %arg5[%c2_47, %c2_48, %c0_49] : memref<18x18x128xf32, #tpu.memory_space<vmem>>, vector<16x16x128xf32>
    %73 = vector.extract_strided_slice %11 {offsets = [8, 0], sizes = [1, 128], strides = [1, 1]} : vector<9x128xf32> to vector<1x128xf32>
    %74 = vector.shape_cast %73 : vector<1x128xf32> to vector<128xf32>
    %75 = vector.shape_cast %74 : vector<128xf32> to vector<1x1x128xf32>
    %76 = vector.broadcast %75 : vector<1x1x128xf32> to vector<16x16x128xf32>
    %77 = arith.mulf %72, %76 : vector<16x16x128xf32>
    %78 = arith.addf %71, %77 : vector<16x16x128xf32>
    %79 = vector.broadcast %14 : vector<1x1x128xf32> to vector<16x16x128xf32>
    %80 = arith.addf %78, %79 : vector<16x16x128xf32>
    %c0_50 = arith.constant 0 : index
    %c0_51 = arith.constant 0 : index
    %c0_52 = arith.constant 0 : index
    %c0_53 = arith.constant 0 : index
    %81 = vector.load %arg4[%c0_50, %c0_51, %c0_52, %c0_53] : memref<1x16x16x128xf32, #tpu.memory_space<vmem>>, vector<1x16x16x128xf32>
    %82 = vector.shape_cast %81 : vector<1x16x16x128xf32> to vector<16x16x128xf32>
    %83 = vector.shape_cast %80 : vector<16x16x128xf32> to vector<1x16x16x128xf32>
    tpu.vector_store %arg4[%c0_50, %c0_51, %c0_52, %c0_53], %83 {strides = array<i32>} : memref<1x16x16x128xf32, #tpu.memory_space<vmem>>, vector<1x16x16x128xf32>,
    return
  }
  func.func @transform_0(%arg0: i32) -> (i32, i32, i32, i32) {
    %c0_i32 = arith.constant 0 : i32
    %c0_i32_0 = arith.constant 0 : i32
    %c0_i32_1 = arith.constant 0 : i32
    %c0_i32_2 = arith.constant 0 : i32
    return %arg0, %c0_i32, %c0_i32_0, %c0_i32_1 : i32, i32, i32, i32
  }
  func.func @transform_1(%arg0: i32) -> (i32, i32) {
    %c0_i32 = arith.constant 0 : i32
    %c0_i32_0 = arith.constant 0 : i32
    %c0_i32_1 = arith.constant 0 : i32
    return %c0_i32, %c0_i32_0 : i32, i32
  }
  func.func @transform_2(%arg0: i32) -> (i32, i32) {
    %c0_i32 = arith.constant 0 : i32
    %c0_i32_0 = arith.constant 0 : i32
    %c0_i32_1 = arith.constant 0 : i32
    return %c0_i32, %c0_i32_0 : i32, i32
  }
  func.func @transform_3(%arg0: i32) -> (i32, i32, i32, i32) {
    %c0_i32 = arith.constant 0 : i32
    %c0_i32_0 = arith.constant 0 : i32
    %c0_i32_1 = arith.constant 0 : i32
    %c0_i32_2 = arith.constant 0 : i32
    return %arg0, %c0_i32, %c0_i32_0, %c0_i32_1 : i32, i32, i32, i32
  }
}

</mosaic_0001>

<llo_original>
// kernel: tpu_custom_call.1
$region0: #{tpu_custom_call.1}
  #allocation0 [shape = 'u32[]', space=smem, size = 0x4, offset = 0x4, fixed_abs, tag = 'smem constant byte address 0x4 - core index']
  #allocation1 [shape = 'u32[144,128]{1,0:T(1,128)}', space=vmem, size = 0x12000, scoped, tag = 'internal scratch']
  #allocation2 [shape = 'f32[18,18,128]{2,1,0:T(8,128)}', space=vmem, size = 0x36000, scoped, tag = 'scratch operand']
  %s0 = inlined_call_operand.hbm [shape: f32[2,16,16,128], index: 0, kind: input, shape index: {}]
  %s1 = inlined_call_operand.hbm [shape: f32[9,128], index: 1, kind: input, shape index: {}]
  %s2 = inlined_call_operand.vmem [shape: f32[1,128], index: 2, kind: input, shape index: {}]
  %s3 = inlined_call_operand.hbm [shape: f32[2,16,16,128], index: 3, kind: output, shape index: {}]
  %s4 = sld [smem:[#allocation0]]
  $region53: #{tpu_custom_call.1} parent=0
    _
  %s6 = ssub.s32 1, %s4
  %s7 = scalar_select 0, %s6, %s4
  $region1: #{tpu_custom_call.1} parent=0
    #allocation3 [shape = 'u8[262144]{0}', space=vmem, size = 0x40000, scoped, tag = 'input window, operand 0']
    #allocation4 [shape = 's32[2]{0}', space=sflag, size = 0x8, scoped, tag = 'scoped memory for tpu_custom_call.1']
    #allocation5 [shape = 's32[2]{0}', space=sflag, size = 0x8, scoped, tag = 'scoped memory for tpu_custom_call.1']
    #allocation6 [shape = 'u8[8192]{0}', space=vmem, size = 0x2000, scoped, tag = 'input window, operand 1, single buffered']
    #allocation7 [shape = 's32[1]{0}', space=sflag, size = 0x4, scoped, tag = 'scoped memory for tpu_custom_call.1']
    #allocation8 [shape = 'u8[262144]{0}', space=vmem, size = 0x40000, scoped, tag = 'output window, operand 0']
    %8 = vsyncpa [#allocation4], 0
    %s9 = scalar_lea.sflag [#allocation4], 1
    %10 = vsyncpa %s9, 0
    %11 = vsyncpa [#allocation7], 0
    %12 = vsyncpa [#allocation5], 0
    %s13 = scalar_lea.sflag [#allocation5], 1
    %14 = vsyncpa %s13, 0
    loop: start=0, step=1, limit=4
    $region2: #{tpu_custom_call.1} parent=1 // loop_pre_header
      _
    $region3: #{tpu_custom_call.1} parent=1 // loop_header
      %s16 = sphi 0, %s20
      %p17 = scmp.ge.s32.totalorder %s16, 4
      %s26 = sphi 0, %s28
      %s29 = sphi 0, %s26
      %s30 = sphi 0, %s29
      %s46 = sphi 0, %s30
      %s50 = sphi 0, %s50
      %s52 = sphi 0, %s50
      %s53 = sphi 0, %s52
      %s67 = sphi 0, %s53
      %s71 = sphi 0, %s71
      %s73 = sphi 0, %s71
      %s74 = sphi 0, %s73
      %s88 = sphi 0, %s74
      %s94 = sphi 0, %s96
      %s97 = sphi 0, %s94
      %s98 = sphi 0, %s97
      %s114 = sphi 0, %s98
    $region4: #{tpu_custom_call.1} parent=1 // loop_header_branch
      %19 = sbr.rel (%p17) target = $region8
    $region5: #{tpu_custom_call.1} parent=1 // loop_body
      %s21 = ssub.s32 %s16, 1
      %s22 = ssub.s32 %s16, 2
      %s23 = sadd.s32 %s16, 1
      %s24 = ssub.s32 %s16, %s23
      %p25 = scmp.eq.s32.totalorder %s24, 0
      %s27 = sadd.s32 %s26, 1
      %s28 = scalar_select %p25, %s26, %s27
      %p31 = pneg %p25
      %p32 = scmp.eq.s32.totalorder %s16, 1
      %p33 = por %p31, %p32
      %p34 = scmp.ne.s32.totalorder %s26, %s29
      %p35 = scmp.eq.s32.totalorder %s16, 0
      %p36 = por %p34, %p35
      %p37 = scmp.ne.s32.totalorder %s26, %s29
      %p38 = scmp.eq.s32.totalorder %s21, 1
      %p39 = por %p37, %p38
      %p40 = scmp.ne.s32.totalorder %s29, %s30
      %p41 = scmp.eq.s32.totalorder %s21, 0
      %p42 = por %p40, %p41
      %p43 = scmp.ne.s32.totalorder %s29, %s30
      %p44 = scmp.eq.s32.totalorder %s22, 1
      %p45 = por %p43, %p44
      %p47 = scmp.ne.s32.totalorder %s30, %s46
      %p48 = scmp.eq.s32.totalorder %s22, 0
      %p49 = por %p47, %p48
      %s51 = sadd.s32 %s50, 1
      %p54 = scmp.eq.s32.totalorder %s16, 1
      %p55 = scmp.ne.s32.totalorder %s50, %s52
      %p56 = scmp.eq.s32.totalorder %s16, 0
      %p57 = por %p55, %p56
      %p58 = scmp.ne.s32.totalorder %s50, %s52
      %p59 = scmp.eq.s32.totalorder %s21, 1
      %p60 = por %p58, %p59
      %p61 = scmp.ne.s32.totalorder %s52, %s53
      %p62 = scmp.eq.s32.totalorder %s21, 0
      %p63 = por %p61, %p62
      %p64 = scmp.ne.s32.totalorder %s52, %s53
      %p65 = scmp.eq.s32.totalorder %s22, 1
      %p66 = por %p64, %p65
      %p68 = scmp.ne.s32.totalorder %s53, %s67
      %p69 = scmp.eq.s32.totalorder %s22, 0
      %p70 = por %p68, %p69
      %s72 = sadd.s32 %s71, 1
      %p75 = scmp.eq.s32.totalorder %s16, 1
      %p76 = scmp.ne.s32.totalorder %s71, %s73
      %p77 = scmp.eq.s32.totalorder %s16, 0
      %p78 = por %p76, %p77
      %p79 = scmp.ne.s32.totalorder %s71, %s73
      %p80 = scmp.eq.s32.totalorder %s21, 1
      %p81 = por %p79, %p80
      %p82 = scmp.ne.s32.totalorder %s73, %s74
      %p83 = scmp.eq.s32.totalorder %s21, 0
      %p84 = por %p82, %p83
      %p85 = scmp.ne.s32.totalorder %s73, %s74
      %p86 = scmp.eq.s32.totalorder %s22, 1
      %p87 = por %p85, %p86
      %p89 = scmp.ne.s32.totalorder %s74, %s88
      %p90 = scmp.eq.s32.totalorder %s22, 0
      %p91 = por %p89, %p90
      %s92 = ssub.s32 %s16, %s23
      %p93 = scmp.eq.s32.totalorder %s92, 0
      %s95 = sadd.s32 %s94, 1
      %s96 = scalar_select %p93, %s94, %s95
      %p99 = pneg %p93
      %p100 = scmp.eq.s32.totalorder %s16, 1
      %p101 = por %p99, %p100
      %p102 = scmp.ne.s32.totalorder %s94, %s97
      %p103 = scmp.eq.s32.totalorder %s16, 0
      %p104 = por %p102, %p103
      %p105 = scmp.ne.s32.totalorder %s94, %s97
      %p106 = scmp.eq.s32.totalorder %s21, 1
      %p107 = por %p105, %p106
      %p108 = scmp.ne.s32.totalorder %s97, %s98
      %p109 = scmp.eq.s32.totalorder %s21, 0
      %p110 = por %p108, %p109
      %p111 = scmp.ne.s32.totalorder %s97, %s98
      %p112 = scmp.eq.s32.totalorder %s22, 1
      %p113 = por %p111, %p112
      %p115 = scmp.ne.s32.totalorder %s98, %s114
      %p116 = scmp.eq.s32.totalorder %s22, 0
      %p117 = por %p115, %p116
      %p118 = scmp.le.s32.totalorder 1, %s16
      %p119 = scmp.lt.s32.totalorder %s16, 3
      %p120 = pnand %p118, %p119
      %p121 = pneg %p120
      // Predicated region
      $region9: #{tpu_custom_call.1} parent=5 // pred_check
        _
      $region10: #{tpu_custom_call.1} parent=5 // pred_check_branch
        %123 = sbr.rel (%p120) target = $region12
      $region11: #{tpu_custom_call.1} parent=5 // pred_region
        %s124 = ssub.s32 %s16, 1
        // Predicated region
        $region13: #{tpu_custom_call.1} parent=11 // pred_check
          %p125 = pneg %p63
        $region14: #{tpu_custom_call.1} parent=11 // pred_check_branch
          %127 = sbr.rel (%p125) target = $region16
        $region15: #{tpu_custom_call.1} parent=11 // pred_region
          %s129 = ssub.s32 256, 256
          %130 = vsyncadd [#allocation7], %s129
          %s131 = sshll.u32 [#allocation6], 4
          %s132 = int_to_ptr.vmem [resolvable:$true] %s131
          %137 = dma.hbm_to_vmem [thread:$0]  %s1, 256, %s132, [#allocation7], 128, 128, 8
        $region16: #{tpu_custom_call.1} parent=11 // pred_fallthru
          _
        // Predicated region
        $region17: #{tpu_custom_call.1} parent=11 // pred_check
          %p138 = pneg %p84
        $region18: #{tpu_custom_call.1} parent=11 // pred_check_branch
          %140 = sbr.rel (%p138) target = $region20
        $region19: #{tpu_custom_call.1} parent=11 // pred_region
          _
        $region20: #{tpu_custom_call.1} parent=11 // pred_fallthru
          _
      $region12: #{tpu_custom_call.1} parent=5 // pred_fallthru
        _
      %p141 = scmp.lt.s32.totalorder %s16, 2
      // Predicated region
      $region21: #{tpu_custom_call.1} parent=5 // pred_check
        %p142 = pneg %p141
      $region22: #{tpu_custom_call.1} parent=5 // pred_check_branch
        %144 = sbr.rel (%p142) target = $region24
      $region23: #{tpu_custom_call.1} parent=5 // pred_region
        // Predicated region
        $region25: #{tpu_custom_call.1} parent=23 // pred_check
          %p145 = pneg %p36
        $region26: #{tpu_custom_call.1} parent=23 // pred_check_branch
          %147 = sbr.rel (%p145) target = $region28
        $region27: #{tpu_custom_call.1} parent=23 // pred_region
          %s148 = sand.u32 %s26, 1
          %s149 = scalar_lea.sflag [#allocation4], %s148
          %s150 = sand.u32 %s26, 1
          %s151 = smul.addr %s150, 256
          %s152 = scalar_lea.vmem [#allocation3], %s151
          %s154 = ssub.s32 4096, 4096
          %155 = vsyncadd %s149, %s154
          %s156 = smul.addr %s16, 32
          %s157 = smul.addr %s156, 128
          %s158 = scalar_lea.hbm %s0, %s157
          %s159 = sshll.u32 %s152, 4
          %s160 = int_to_ptr.vmem [resolvable:$true] %s159
          %165 = dma.hbm_to_vmem [thread:$0]  %s158, 4096, %s160, %s149, 128, 128, 8
        $region28: #{tpu_custom_call.1} parent=23 // pred_fallthru
          _
      $region24: #{tpu_custom_call.1} parent=5 // pred_fallthru
        _
      %p166 = scmp.le.s32.totalorder 1, %s16
      %p167 = scmp.lt.s32.totalorder %s16, 3
      %p168 = pnand %p166, %p167
      %p169 = pneg %p168
      // Predicated region
      $region29: #{tpu_custom_call.1} parent=5 // pred_check
        _
      $region30: #{tpu_custom_call.1} parent=5 // pred_check_branch
        %171 = sbr.rel (%p168) target = $region32
      $region31: #{tpu_custom_call.1} parent=5 // pred_region
        %s172 = ssub.s32 %s16, 1
        %s173 = sand.u32 %s29, 1
        %s174 = scalar_lea.sflag [#allocation4], %s173
        %s175 = sand.u32 %s29, 1
        %s176 = smul.addr %s175, 256
        %s177 = scalar_lea.vmem [#allocation3], %s176
        // Predicated region
        $region33: #{tpu_custom_call.1} parent=31 // pred_check
          %p178 = pneg %p42
        $region34: #{tpu_custom_call.1} parent=31 // pred_check_branch
          %180 = sbr.rel (%p178) target = $region36
        $region35: #{tpu_custom_call.1} parent=31 // pred_region
          %181 = dma.done %s174, 4096
        $region36: #{tpu_custom_call.1} parent=31 // pred_fallthru
          _
        // Predicated region
        $region37: #{tpu_custom_call.1} parent=31 // pred_check
          %p182 = pneg %p63
        $region38: #{tpu_custom_call.1} parent=31 // pred_check_branch
          %184 = sbr.rel (%p182) target = $region40
        $region39: #{tpu_custom_call.1} parent=31 // pred_region
          %185 = dma.done [#allocation7], 256
        $region40: #{tpu_custom_call.1} parent=31 // pred_fallthru
          _
        %s186 = sand.u32 %s29, 1
        %s187 = scalar_lea.sflag [#allocation4], %s186
        %s188 = sand.u32 %s29, 1
        %s189 = smul.addr %s188, 256
        %s190 = scalar_lea.vmem [#allocation3], %s189
        %p191 = pneg %p42
        %p192 = pneg %p39
        %p193 = pneg %p63
        %p194 = pneg %p60
        %p195 = pneg %p84
        %p196 = pneg %p81
        %p197 = pneg %p110
        %p198 = pneg %p107
        %s199 = sand.u32 %s97, 1
        %s200 = scalar_lea.sflag [#allocation5], %s199
        %s201 = sand.u32 %s97, 1
        %s202 = smul.addr %s201, 256
        %s203 = scalar_lea.vmem [#allocation8], %s202
        %204 = vst [vmem:[#allocation2] sm:$0xff] 0.0
        %205 = vst [vmem:[#allocation2 + $0x8] sm:$0xff] 0.0
        %206 = vst [vmem:[#allocation2 + $0x10] sm:$0x3] 0.0
        %s207 = scalar_lea.vmem [#allocation2], 408
        %208 = vst [vmem:[%s207] sm:$0xff] 0.0
        %209 = vst [vmem:[%s207 + $0x8] sm:$0xff] 0.0
        %210 = vst [vmem:[%s207 + $0x10] sm:$0x3] 0.0
        %s211 = scalar_lea.vmem [#allocation2], 24
        %212 = vst [vmem:[%s211] sm:$0x1] 0.0
        %213 = vst [vmem:[%s211 + $0x18] sm:$0x1] 0.0
        %214 = vst [vmem:[%s211 + $0x30] sm:$0x1] 0.0
        %215 = vst [vmem:[%s211 + $0x48] sm:$0x1] 0.0
        %216 = vst [vmem:[%s211 + $0x60] sm:$0x1] 0.0
        %217 = vst [vmem:[%s211 + $0x78] sm:$0x1] 0.0
        %218 = vst [vmem:[%s211 + $0x90] sm:$0x1] 0.0
        %219 = vst [vmem:[%s211 + $0xa8] sm:$0x1] 0.0
        %220 = vst [vmem:[%s211 + $0xc0] sm:$0x1] 0.0
        %221 = vst [vmem:[%s211 + $0xd8] sm:$0x1] 0.0
        %222 = vst [vmem:[%s211 + $0xf0] sm:$0x1] 0.0
        %223 = vst [vmem:[%s211 + $0x108] sm:$0x1] 0.0
        %224 = vst [vmem:[%s211 + $0x120] sm:$0x1] 0.0
        %225 = vst [vmem:[%s211 + $0x138] sm:$0x1] 0.0
        %226 = vst [vmem:[%s211 + $0x150] sm:$0x1] 0.0
        %227 = vst [vmem:[%s211 + $0x168] sm:$0x1] 0.0
        %228 = vst [vmem:[%s211 + $0x11] sm:$0x1] 0.0
        %229 = vst [vmem:[%s211 + $0x29] sm:$0x1] 0.0
        %230 = vst [vmem:[%s211 + $0x41] sm:$0x1] 0.0
        %231 = vst [vmem:[%s211 + $0x59] sm:$0x1] 0.0
        %232 = vst [vmem:[%s211 + $0x71] sm:$0x1] 0.0
        %233 = vst [vmem:[%s211 + $0x89] sm:$0x1] 0.0
        %234 = vst [vmem:[%s211 + $0xa1] sm:$0x1] 0.0
        %235 = vst [vmem:[%s211 + $0xb9] sm:$0x1] 0.0
        %236 = vst [vmem:[%s211 + $0xd1] sm:$0x1] 0.0
        %237 = vst [vmem:[%s211 + $0xe9] sm:$0x1] 0.0
        %238 = vst [vmem:[%s211 + $0x101] sm:$0x1] 0.0
        %239 = vst [vmem:[%s211 + $0x119] sm:$0x1] 0.0
        %240 = vst [vmem:[%s211 + $0x131] sm:$0x1] 0.0
        %241 = vst [vmem:[%s211 + $0x149] sm:$0x1] 0.0
        %242 = vst [vmem:[%s211 + $0x161] sm:$0x1] 0.0
        %243 = vst [vmem:[%s211 + $0x179] sm:$0x1] 0.0
        %v244 = vld [vmem:[%s177] sm:$0xff]
        %v245 = vld [vmem:[%s177 + $0x8] sm:$0xff]
        %v246 = vld [vmem:[%s177 + $0x10] sm:$0xff]
        %v247 = vld [vmem:[%s177 + $0x18] sm:$0xff]
        %v248 = vld [vmem:[%s177 + $0x20] sm:$0xff]
        %v249 = vld [vmem:[%s177 + $0x28] sm:$0xff]
        %v250 = vld [vmem:[%s177 + $0x30] sm:$0xff]
        %v251 = vld [vmem:[%s177 + $0x38] sm:$0xff]
        %v252 = vld [vmem:[%s177 + $0x40] sm:$0xff]
        %v253 = vld [vmem:[%s177 + $0x48] sm:$0xff]
        %v254 = vld [vmem:[%s177 + $0x50] sm:$0xff]
        %v255 = vld [vmem:[%s177 + $0x58] sm:$0xff]
        %v256 = vld [vmem:[%s177 + $0x60] sm:$0xff]
        %v257 = vld [vmem:[%s177 + $0x68] sm:$0xff]
        %v258 = vld [vmem:[%s177 + $0x70] sm:$0xff]
        %v259 = vld [vmem:[%s177 + $0x78] sm:$0xff]
        %v260 = vld [vmem:[%s177 + $0x80] sm:$0xff]
        %v261 = vld [vmem:[%s177 + $0x88] sm:$0xff]
        %v262 = vld [vmem:[%s177 + $0x90] sm:$0xff]
        %v263 = vld [vmem:[%s177 + $0x98] sm:$0xff]
        %v264 = vld [vmem:[%s177 + $0xa0] sm:$0xff]
        %v265 = vld [vmem:[%s177 + $0xa8] sm:$0xff]
        %v266 = vld [vmem:[%s177 + $0xb0] sm:$0xff]
        %v267 = vld [vmem:[%s177 + $0xb8] sm:$0xff]
        %v268 = vld [vmem:[%s177 + $0xc0] sm:$0xff]
        %v269 = vld [vmem:[%s177 + $0xc8] sm:$0xff]
        %v270 = vld [vmem:[%s177 + $0xd0] sm:$0xff]
        %v271 = vld [vmem:[%s177 + $0xd8] sm:$0xff]
        %v272 = vld [vmem:[%s177 + $0xe0] sm:$0xff]
        %v273 = vld [vmem:[%s177 + $0xe8] sm:$0xff]
        %v274 = vld [vmem:[%s177 + $0xf0] sm:$0xff]
        %v275 = vld [vmem:[%s177 + $0xf8] sm:$0xff]
        %276 = vst [vmem:[%s211 + $0x1] sm:$0xff] %v244
        %277 = vst [vmem:[%s211 + $0x9] sm:$0xff] %v245
        %278 = vst [vmem:[%s211 + $0x19] sm:$0xff] %v246
        %279 = vst [vmem:[%s211 + $0x21] sm:$0xff] %v247
        %280 = vst [vmem:[%s211 + $0x31] sm:$0xff] %v248
        %281 = vst [vmem:[%s211 + $0x39] sm:$0xff] %v249
        %282 = vst [vmem:[%s211 + $0x49] sm:$0xff] %v250
        %283 = vst [vmem:[%s211 + $0x51] sm:$0xff] %v251
        %284 = vst [vmem:[%s211 + $0x61] sm:$0xff] %v252
        %285 = vst [vmem:[%s211 + $0x69] sm:$0xff] %v253
        %286 = vst [vmem:[%s211 + $0x79] sm:$0xff] %v254
        %287 = vst [vmem:[%s211 + $0x81] sm:$0xff] %v255
        %288 = vst [vmem:[%s211 + $0x91] sm:$0xff] %v256
        %289 = vst [vmem:[%s211 + $0x99] sm:$0xff] %v257
        %290 = vst [vmem:[%s211 + $0xa9] sm:$0xff] %v258
        %291 = vst [vmem:[%s211 + $0xb1] sm:$0xff] %v259
        %292 = vst [vmem:[%s211 + $0xc1] sm:$0xff] %v260
        %293 = vst [vmem:[%s211 + $0xc9] sm:$0xff] %v261
        %294 = vst [vmem:[%s211 + $0xd9] sm:$0xff] %v262
        %295 = vst [vmem:[%s211 + $0xe1] sm:$0xff] %v263
        %296 = vst [vmem:[%s211 + $0xf1] sm:$0xff] %v264
        %297 = vst [vmem:[%s211 + $0xf9] sm:$0xff] %v265
        %298 = vst [vmem:[%s211 + $0x109] sm:$0xff] %v266
        %299 = vst [vmem:[%s211 + $0x111] sm:$0xff] %v267
        %300 = vst [vmem:[%s211 + $0x121] sm:$0xff] %v268
        %301 = vst [vmem:[%s211 + $0x129] sm:$0xff] %v269
        %302 = vst [vmem:[%s211 + $0x139] sm:$0xff] %v270
        %303 = vst [vmem:[%s211 + $0x141] sm:$0xff] %v271
        %304 = vst [vmem:[%s211 + $0x151] sm:$0xff] %v272
        %305 = vst [vmem:[%s211 + $0x159] sm:$0xff] %v273
        %306 = vst [vmem:[%s211 + $0x169] sm:$0xff] %v274
        %307 = vst [vmem:[%s211 + $0x171] sm:$0xff] %v275
        %v308 = vld [vmem:[#allocation6] sm:$0xff]
        %v309 = vld [vmem:[#allocation6 + $0x8] sm:$0x1]
        %v310 = vld [vmem:[%s2] sm:$0x1]
        %v311 = vld [vmem:[#allocation2] sm:$0xff]
        %v312 = vld [vmem:[#allocation2 + $0x8] sm:$0xff]
        %v313 = vld [vmem:[#allocation2 + $0x18] sm:$0xff]
        %v314 = vld [vmem:[#allocation2 + $0x20] sm:$0xff]
        %v315 = vld [vmem:[#allocation2 + $0x30] sm:$0xff]
        %v316 = vld [vmem:[#allocation2 + $0x38] sm:$0xff]
        %v317 = vld [vmem:[#allocation2 + $0x48] sm:$0xff]
        %v318 = vld [vmem:[#allocation2 + $0x50] sm:$0xff]
        %v319 = vld [vmem:[#allocation2 + $0x60] sm:$0xff]
        %v320 = vld [vmem:[#allocation2 + $0x68] sm:$0xff]
        %v321 = vld [vmem:[#allocation2 + $0x78] sm:$0xff]
        %v322 = vld [vmem:[#allocation2 + $0x80] sm:$0xff]
        %v323 = vld [vmem:[#allocation2 + $0x90] sm:$0xff]
        %v324 = vld [vmem:[#allocation2 + $0x98] sm:$0xff]
        %v325 = vld [vmem:[#allocation2 + $0xa8] sm:$0xff]
        %v326 = vld [vmem:[#allocation2 + $0xb0] sm:$0xff]
        %v327 = vld [vmem:[#allocation2 + $0xc0] sm:$0xff]
        %v328 = vld [vmem:[#allocation2 + $0xc8] sm:$0xff]
        %v329 = vld [vmem:[#allocation2 + $0xd8] sm:$0xff]
        %v330 = vld [vmem:[#allocation2 + $0xe0] sm:$0xff]
        %v331 = vld [vmem:[#allocation2 + $0xf0] sm:$0xff]
        %v332 = vld [vmem:[#allocation2 + $0xf8] sm:$0xff]
        %v333 = vld [vmem:[#allocation2 + $0x108] sm:$0xff]
        %v334 = vld [vmem:[#allocation2 + $0x110] sm:$0xff]
        %v335 = vld [vmem:[#allocation2 + $0x120] sm:$0xff]
        %v336 = vld [vmem:[#allocation2 + $0x128] sm:$0xff]
        %v337 = vld [vmem:[#allocation2 + $0x138] sm:$0xff]
        %v338 = vld [vmem:[#allocation2 + $0x140] sm:$0xff]
        %v339 = vld [vmem:[#allocation2 + $0x150] sm:$0xff]
        %v340 = vld [vmem:[#allocation2 + $0x158] sm:$0xff]
        %v341 = vld [vmem:[#allocation2 + $0x168] sm:$0xff]
        %v342 = vld [vmem:[#allocation2 + $0x170] sm:$0xff]
        %v343 = vlaneseq
        %v344 = vshrl.u32 %v343, 7
        %v345 = vsub.s32 0, %v344
        %v346 = vrot.slane %v308, %v345
        %v347 = vmul.f32 %v311, %v346
        %v348 = vmul.f32 %v312, %v346
        %v349 = vmul.f32 %v313, %v346
        %v350 = vmul.f32 %v314, %v346
        %v351 = vmul.f32 %v315, %v346
        %v352 = vmul.f32 %v316, %v346
        %v353 = vmul.f32 %v317, %v346
        %v354 = vmul.f32 %v318, %v346
        %v355 = vmul.f32 %v319, %v346
        %v356 = vmul.f32 %v320, %v346
        %v357 = vmul.f32 %v321, %v346
        %v358 = vmul.f32 %v322, %v346
        %v359 = vmul.f32 %v323, %v346
        %v360 = vmul.f32 %v324, %v346
        %v361 = vmul.f32 %v325, %v346
        %v362 = vmul.f32 %v326, %v346
        %v363 = vmul.f32 %v327, %v346
        %v364 = vmul.f32 %v328, %v346
        %v365 = vmul.f32 %v329, %v346
        %v366 = vmul.f32 %v330, %v346
        %v367 = vmul.f32 %v331, %v346
        %v368 = vmul.f32 %v332, %v346
        %v369 = vmul.f32 %v333, %v346
        %v370 = vmul.f32 %v334, %v346
        %v371 = vmul.f32 %v335, %v346
        %v372 = vmul.f32 %v336, %v346
        %v373 = vmul.f32 %v337, %v346
        %v374 = vmul.f32 %v338, %v346
        %v375 = vmul.f32 %v339, %v346
        %v376 = vmul.f32 %v340, %v346
        %v377 = vmul.f32 %v341, %v346
        %v378 = vmul.f32 %v342, %v346
        %v379 = vadd.f32 %v347, 0.0
        %v380 = vadd.f32 %v348, 0.0
        %v381 = vadd.f32 %v349, 0.0
        %v382 = vadd.f32 %v350, 0.0
        %v383 = vadd.f32 %v351, 0.0
        %v384 = vadd.f32 %v352, 0.0
        %v385 = vadd.f32 %v353, 0.0
        %v386 = vadd.f32 %v354, 0.0
        %v387 = vadd.f32 %v355, 0.0
        %v388 = vadd.f32 %v356, 0.0
        %v389 = vadd.f32 %v357, 0.0
        %v390 = vadd.f32 %v358, 0.0
        %v391 = vadd.f32 %v359, 0.0
        %v392 = vadd.f32 %v360, 0.0
        %v393 = vadd.f32 %v361, 0.0
        %v394 = vadd.f32 %v362, 0.0
        %v395 = vadd.f32 %v363, 0.0
        %v396 = vadd.f32 %v364, 0.0
        %v397 = vadd.f32 %v365, 0.0
        %v398 = vadd.f32 %v366, 0.0
        %v399 = vadd.f32 %v367, 0.0
        %v400 = vadd.f32 %v368, 0.0
        %v401 = vadd.f32 %v369, 0.0
        %v402 = vadd.f32 %v370, 0.0
        %v403 = vadd.f32 %v371, 0.0
        %v404 = vadd.f32 %v372, 0.0
        %v405 = vadd.f32 %v373, 0.0
        %v406 = vadd.f32 %v374, 0.0
        %v407 = vadd.f32 %v375, 0.0
        %v408 = vadd.f32 %v376, 0.0
        %v409 = vadd.f32 %v377, 0.0
        %v410 = vadd.f32 %v378, 0.0
        %v411 = vld [vmem:[#allocation2 + $0x1] sm:$0xff]
        %v412 = vld [vmem:[#allocation2 + $0x9] sm:$0xff]
        %v413 = vld [vmem:[#allocation2 + $0x19] sm:$0xff]
        %v414 = vld [vmem:[#allocation2 + $0x21] sm:$0xff]
        %v415 = vld [vmem:[#allocation2 + $0x31] sm:$0xff]
        %v416 = vld [vmem:[#allocation2 + $0x39] sm:$0xff]
        %v417 = vld [vmem:[#allocation2 + $0x49] sm:$0xff]
        %v418 = vld [vmem:[#allocation2 + $0x51] sm:$0xff]
        %v419 = vld [vmem:[#allocation2 + $0x61] sm:$0xff]
        %v420 = vld [vmem:[#allocation2 + $0x69] sm:$0xff]
        %v421 = vld [vmem:[#allocation2 + $0x79] sm:$0xff]
        %v422 = vld [vmem:[#allocation2 + $0x81] sm:$0xff]
        %v423 = vld [vmem:[#allocation2 + $0x91] sm:$0xff]
        %v424 = vld [vmem:[#allocation2 + $0x99] sm:$0xff]
        %v425 = vld [vmem:[#allocation2 + $0xa9] sm:$0xff]
        %v426 = vld [vmem:[#allocation2 + $0xb1] sm:$0xff]
        %v427 = vld [vmem:[#allocation2 + $0xc1] sm:$0xff]
        %v428 = vld [vmem:[#allocation2 + $0xc9] sm:$0xff]
        %v429 = vld [vmem:[#allocation2 + $0xd9] sm:$0xff]
        %v430 = vld [vmem:[#allocation2 + $0xe1] sm:$0xff]
        %v431 = vld [vmem:[#allocation2 + $0xf1] sm:$0xff]
        %v432 = vld [vmem:[#allocation2 + $0xf9] sm:$0xff]
        %v433 = vld [vmem:[#allocation2 + $0x109] sm:$0xff]
        %v434 = vld [vmem:[#allocation2 + $0x111] sm:$0xff]
        %v435 = vld [vmem:[#allocation2 + $0x121] sm:$0xff]
        %v436 = vld [vmem:[#allocation2 + $0x129] sm:$0xff]
        %v437 = vld [vmem:[#allocation2 + $0x139] sm:$0xff]
        %v438 = vld [vmem:[#allocation2 + $0x141] sm:$0xff]
        %v439 = vld [vmem:[#allocation2 + $0x151] sm:$0xff]
        %v440 = vld [vmem:[#allocation2 + $0x159] sm:$0xff]
        %v441 = vld [vmem:[#allocation2 + $0x169] sm:$0xff]
        %v442 = vld [vmem:[#allocation2 + $0x171] sm:$0xff]
        %v443 = vlaneseq
        %v444 = vshrl.u32 %v443, 7
        %v445 = vsub.s32 1, %v444
        %v446 = vrot.slane %v308, %v445
        %v447 = vmul.f32 %v411, %v446
        %v448 = vmul.f32 %v412, %v446
        %v449 = vmul.f32 %v413, %v446
        %v450 = vmul.f32 %v414, %v446
        %v451 = vmul.f32 %v415, %v446
        %v452 = vmul.f32 %v416, %v446
        %v453 = vmul.f32 %v417, %v446
        %v454 = vmul.f32 %v418, %v446
        %v455 = vmul.f32 %v419, %v446
        %v456 = vmul.f32 %v420, %v446
        %v457 = vmul.f32 %v421, %v446
        %v458 = vmul.f32 %v422, %v446
        %v459 = vmul.f32 %v423, %v446
        %v460 = vmul.f32 %v424, %v446
        %v461 = vmul.f32 %v425, %v446
        %v462 = vmul.f32 %v426, %v446
        %v463 = vmul.f32 %v427, %v446
        %v464 = vmul.f32 %v428, %v446
        %v465 = vmul.f32 %v429, %v446
        %v466 = vmul.f32 %v430, %v446
        %v467 = vmul.f32 %v431, %v446
        %v468 = vmul.f32 %v432, %v446
        %v469 = vmul.f32 %v433, %v446
        %v470 = vmul.f32 %v434, %v446
        %v471 = vmul.f32 %v435, %v446
        %v472 = vmul.f32 %v436, %v446
        %v473 = vmul.f32 %v437, %v446
        %v474 = vmul.f32 %v438, %v446
        %v475 = vmul.f32 %v439, %v446
        %v476 = vmul.f32 %v440, %v446
        %v477 = vmul.f32 %v441, %v446
        %v478 = vmul.f32 %v442, %v446
        %v479 = vadd.f32 %v379, %v447
        %v480 = vadd.f32 %v380, %v448
        %v481 = vadd.f32 %v381, %v449
        %v482 = vadd.f32 %v382, %v450
        %v483 = vadd.f32 %v383, %v451
        %v484 = vadd.f32 %v384, %v452
        %v485 = vadd.f32 %v385, %v453
        %v486 = vadd.f32 %v386, %v454
        %v487 = vadd.f32 %v387, %v455
        %v488 = vadd.f32 %v388, %v456
        %v489 = vadd.f32 %v389, %v457
        %v490 = vadd.f32 %v390, %v458
        %v491 = vadd.f32 %v391, %v459
        %v492 = vadd.f32 %v392, %v460
        %v493 = vadd.f32 %v393, %v461
        %v494 = vadd.f32 %v394, %v462
        %v495 = vadd.f32 %v395, %v463
        %v496 = vadd.f32 %v396, %v464
        %v497 = vadd.f32 %v397, %v465
        %v498 = vadd.f32 %v398, %v466
        %v499 = vadd.f32 %v399, %v467
        %v500 = vadd.f32 %v400, %v468
        %v501 = vadd.f32 %v401, %v469
        %v502 = vadd.f32 %v402, %v470
        %v503 = vadd.f32 %v403, %v471
        %v504 = vadd.f32 %v404, %v472
        %v505 = vadd.f32 %v405, %v473
        %v506 = vadd.f32 %v406, %v474
        %v507 = vadd.f32 %v407, %v475
        %v508 = vadd.f32 %v408, %v476
        %v509 = vadd.f32 %v409, %v477
        %v510 = vadd.f32 %v410, %v478
        %v511 = vld [vmem:[#allocation2 + $0x2] sm:$0xff]
        %v512 = vld [vmem:[#allocation2 + $0xa] sm:$0xff]
        %v513 = vld [vmem:[#allocation2 + $0x1a] sm:$0xff]
        %v514 = vld [vmem:[#allocation2 + $0x22] sm:$0xff]
        %v515 = vld [vmem:[#allocation2 + $0x32] sm:$0xff]
        %v516 = vld [vmem:[#allocation2 + $0x3a] sm:$0xff]
        %v517 = vld [vmem:[#allocation2 + $0x4a] sm:$0xff]
        %v518 = vld [vmem:[#allocation2 + $0x52] sm:$0xff]
        %v519 = vld [vmem:[#allocation2 + $0x62] sm:$0xff]
        %v520 = vld [vmem:[#allocation2 + $0x6a] sm:$0xff]
        %v521 = vld [vmem:[#allocation2 + $0x7a] sm:$0xff]
        %v522 = vld [vmem:[#allocation2 + $0x82] sm:$0xff]
        %v523 = vld [vmem:[#allocation2 + $0x92] sm:$0xff]
        %v524 = vld [vmem:[#allocation2 + $0x9a] sm:$0xff]
        %v525 = vld [vmem:[#allocation2 + $0xaa] sm:$0xff]
        %v526 = vld [vmem:[#allocation2 + $0xb2] sm:$0xff]
        %v527 = vld [vmem:[#allocation2 + $0xc2] sm:$0xff]
        %v528 = vld [vmem:[#allocation2 + $0xca] sm:$0xff]
        %v529 = vld [vmem:[#allocation2 + $0xda] sm:$0xff]
        %v530 = vld [vmem:[#allocation2 + $0xe2] sm:$0xff]
        %v531 = vld [vmem:[#allocation2 + $0xf2] sm:$0xff]
        %v532 = vld [vmem:[#allocation2 + $0xfa] sm:$0xff]
        %v533 = vld [vmem:[#allocation2 + $0x10a] sm:$0xff]
        %v534 = vld [vmem:[#allocation2 + $0x112] sm:$0xff]
        %v535 = vld [vmem:[#allocation2 + $0x122] sm:$0xff]
        %v536 = vld [vmem:[#allocation2 + $0x12a] sm:$0xff]
        %v537 = vld [vmem:[#allocation2 + $0x13a] sm:$0xff]
        %v538 = vld [vmem:[#allocation2 + $0x142] sm:$0xff]
        %v539 = vld [vmem:[#allocation2 + $0x152] sm:$0xff]
        %v540 = vld [vmem:[#allocation2 + $0x15a] sm:$0xff]
        %v541 = vld [vmem:[#allocation2 + $0x16a] sm:$0xff]
        %v542 = vld [vmem:[#allocation2 + $0x172] sm:$0xff]
        %v543 = vlaneseq
        %v544 = vshrl.u32 %v543, 7
        %v545 = vsub.s32 2, %v544
        %v546 = vrot.slane %v308, %v545
        %v547 = vmul.f32 %v511, %v546
        %v548 = vmul.f32 %v512, %v546
        %v549 = vmul.f32 %v513, %v546
        %v550 = vmul.f32 %v514, %v546
        %v551 = vmul.f32 %v515, %v546
        %v552 = vmul.f32 %v516, %v546
        %v553 = vmul.f32 %v517, %v546
        %v554 = vmul.f32 %v518, %v546
        %v555 = vmul.f32 %v519, %v546
        %v556 = vmul.f32 %v520, %v546
        %v557 = vmul.f32 %v521, %v546
        %v558 = vmul.f32 %v522, %v546
        %v559 = vmul.f32 %v523, %v546
        %v560 = vmul.f32 %v524, %v546
        %v561 = vmul.f32 %v525, %v546
        %v562 = vmul.f32 %v526, %v546
        %v563 = vmul.f32 %v527, %v546
        %v564 = vmul.f32 %v528, %v546
        %v565 = vmul.f32 %v529, %v546
        %v566 = vmul.f32 %v530, %v546
        %v567 = vmul.f32 %v531, %v546
        %v568 = vmul.f32 %v532, %v546
        %v569 = vmul.f32 %v533, %v546
        %v570 = vmul.f32 %v534, %v546
        %v571 = vmul.f32 %v535, %v546
        %v572 = vmul.f32 %v536, %v546
        %v573 = vmul.f32 %v537, %v546
        %v574 = vmul.f32 %v538, %v546
        %v575 = vmul.f32 %v539, %v546
        %v576 = vmul.f32 %v540, %v546
        %v577 = vmul.f32 %v541, %v546
        %v578 = vmul.f32 %v542, %v546
        %v579 = vadd.f32 %v479, %v547
        %v580 = vadd.f32 %v480, %v548
        %v581 = vadd.f32 %v481, %v549
        %v582 = vadd.f32 %v482, %v550
        %v583 = vadd.f32 %v483, %v551
        %v584 = vadd.f32 %v484, %v552
        %v585 = vadd.f32 %v485, %v553
        %v586 = vadd.f32 %v486, %v554
        %v587 = vadd.f32 %v487, %v555
        %v588 = vadd.f32 %v488, %v556
        %v589 = vadd.f32 %v489, %v557
        %v590 = vadd.f32 %v490, %v558
        %v591 = vadd.f32 %v491, %v559
        %v592 = vadd.f32 %v492, %v560
        %v593 = vadd.f32 %v493, %v561
        %v594 = vadd.f32 %v494, %v562
        %v595 = vadd.f32 %v495, %v563
        %v596 = vadd.f32 %v496, %v564
        %v597 = vadd.f32 %v497, %v565
        %v598 = vadd.f32 %v498, %v566
        %v599 = vadd.f32 %v499, %v567
        %v600 = vadd.f32 %v500, %v568
        %v601 = vadd.f32 %v501, %v569
        %v602 = vadd.f32 %v502, %v570
        %v603 = vadd.f32 %v503, %v571
        %v604 = vadd.f32 %v504, %v572
        %v605 = vadd.f32 %v505, %v573
        %v606 = vadd.f32 %v506, %v574
        %v607 = vadd.f32 %v507, %v575
        %v608 = vadd.f32 %v508, %v576
        %v609 = vadd.f32 %v509, %v577
        %v610 = vadd.f32 %v510, %v578
        %v611 = vld [vmem:[%s211] sm:$0xff]
        %v612 = vld [vmem:[%s211 + $0x8] sm:$0xff]
        %v613 = vld [vmem:[%s211 + $0x18] sm:$0xff]
        %v614 = vld [vmem:[%s211 + $0x20] sm:$0xff]
        %v615 = vld [vmem:[%s211 + $0x30] sm:$0xff]
        %v616 = vld [vmem:[%s211 + $0x38] sm:$0xff]
        %v617 = vld [vmem:[%s211 + $0x48] sm:$0xff]
        %v618 = vld [vmem:[%s211 + $0x50] sm:$0xff]
        %v619 = vld [vmem:[%s211 + $0x60] sm:$0xff]
        %v620 = vld [vmem:[%s211 + $0x68] sm:$0xff]
        %v621 = vld [vmem:[%s211 + $0x78] sm:$0xff]
        %v622 = vld [vmem:[%s211 + $0x80] sm:$0xff]
        %v623 = vld [vmem:[%s211 + $0x90] sm:$0xff]
        %v624 = vld [vmem:[%s211 + $0x98] sm:$0xff]
        %v625 = vld [vmem:[%s211 + $0xa8] sm:$0xff]
        %v626 = vld [vmem:[%s211 + $0xb0] sm:$0xff]
        %v627 = vld [vmem:[%s211 + $0xc0] sm:$0xff]
        %v628 = vld [vmem:[%s211 + $0xc8] sm:$0xff]
        %v629 = vld [vmem:[%s211 + $0xd8] sm:$0xff]
        %v630 = vld [vmem:[%s211 + $0xe0] sm:$0xff]
        %v631 = vld [vmem:[%s211 + $0xf0] sm:$0xff]
        %v632 = vld [vmem:[%s211 + $0xf8] sm:$0xff]
        %v633 = vld [vmem:[%s211 + $0x108] sm:$0xff]
        %v634 = vld [vmem:[%s211 + $0x110] sm:$0xff]
        %v635 = vld [vmem:[%s211 + $0x120] sm:$0xff]
        %v636 = vld [vmem:[%s211 + $0x128] sm:$0xff]
        %v637 = vld [vmem:[%s211 + $0x138] sm:$0xff]
        %v638 = vld [vmem:[%s211 + $0x140] sm:$0xff]
        %v639 = vld [vmem:[%s211 + $0x150] sm:$0xff]
        %v640 = vld [vmem:[%s211 + $0x158] sm:$0xff]
        %v641 = vld [vmem:[%s211 + $0x168] sm:$0xff]
        %v642 = vld [vmem:[%s211 + $0x170] sm:$0xff]
        %v643 = vlaneseq
        %v644 = vshrl.u32 %v643, 7
        %v645 = vsub.s32 3, %v644
        %v646 = vrot.slane %v308, %v645
        %v647 = vmul.f32 %v611, %v646
        %v648 = vmul.f32 %v612, %v646
        %v649 = vmul.f32 %v613, %v646
        %v650 = vmul.f32 %v614, %v646
        %v651 = vmul.f32 %v615, %v646
        %v652 = vmul.f32 %v616, %v646
        %v653 = vmul.f32 %v617, %v646
        %v654 = vmul.f32 %v618, %v646
        %v655 = vmul.f32 %v619, %v646
        %v656 = vmul.f32 %v620, %v646
        %v657 = vmul.f32 %v621, %v646
        %v658 = vmul.f32 %v622, %v646
        %v659 = vmul.f32 %v623, %v646
        %v660 = vmul.f32 %v624, %v646
        %v661 = vmul.f32 %v625, %v646
        %v662 = vmul.f32 %v626, %v646
        %v663 = vmul.f32 %v627, %v646
        %v664 = vmul.f32 %v628, %v646
        %v665 = vmul.f32 %v629, %v646
        %v666 = vmul.f32 %v630, %v646
        %v667 = vmul.f32 %v631, %v646
        %v668 = vmul.f32 %v632, %v646
        %v669 = vmul.f32 %v633, %v646
        %v670 = vmul.f32 %v634, %v646
        %v671 = vmul.f32 %v635, %v646
        %v672 = vmul.f32 %v636, %v646
        %v673 = vmul.f32 %v637, %v646
        %v674 = vmul.f32 %v638, %v646
        %v675 = vmul.f32 %v639, %v646
        %v676 = vmul.f32 %v640, %v646
        %v677 = vmul.f32 %v641, %v646
        %v678 = vmul.f32 %v642, %v646
        %v679 = vadd.f32 %v579, %v647
        %v680 = vadd.f32 %v580, %v648
        %v681 = vadd.f32 %v581, %v649
        %v682 = vadd.f32 %v582, %v650
        %v683 = vadd.f32 %v583, %v651
        %v684 = vadd.f32 %v584, %v652
        %v685 = vadd.f32 %v585, %v653
        %v686 = vadd.f32 %v586, %v654
        %v687 = vadd.f32 %v587, %v655
        %v688 = vadd.f32 %v588, %v656
        %v689 = vadd.f32 %v589, %v657
        %v690 = vadd.f32 %v590, %v658
        %v691 = vadd.f32 %v591, %v659
        %v692 = vadd.f32 %v592, %v660
        %v693 = vadd.f32 %v593, %v661
        %v694 = vadd.f32 %v594, %v662
        %v695 = vadd.f32 %v595, %v663
        %v696 = vadd.f32 %v596, %v664
        %v697 = vadd.f32 %v597, %v665
        %v698 = vadd.f32 %v598, %v666
        %v699 = vadd.f32 %v599, %v667
        %v700 = vadd.f32 %v600, %v668
        %v701 = vadd.f32 %v601, %v669
        %v702 = vadd.f32 %v602, %v670
        %v703 = vadd.f32 %v603, %v671
        %v704 = vadd.f32 %v604, %v672
        %v705 = vadd.f32 %v605, %v673
        %v706 = vadd.f32 %v606, %v674
        %v707 = vadd.f32 %v607, %v675
        %v708 = vadd.f32 %v608, %v676
        %v709 = vadd.f32 %v609, %v677
        %v710 = vadd.f32 %v610, %v678
        %v711 = vld [vmem:[%s211 + $0x1] sm:$0xff]
        %v712 = vld [vmem:[%s211 + $0x9] sm:$0xff]
        %v713 = vld [vmem:[%s211 + $0x19] sm:$0xff]
        %v714 = vld [vmem:[%s211 + $0x21] sm:$0xff]
        %v715 = vld [vmem:[%s211 + $0x31] sm:$0xff]
        %v716 = vld [vmem:[%s211 + $0x39] sm:$0xff]
        %v717 = vld [vmem:[%s211 + $0x49] sm:$0xff]
        %v718 = vld [vmem:[%s211 + $0x51] sm:$0xff]
        %v719 = vld [vmem:[%s211 + $0x61] sm:$0xff]
        %v720 = vld [vmem:[%s211 + $0x69] sm:$0xff]
        %v721 = vld [vmem:[%s211 + $0x79] sm:$0xff]
        %v722 = vld [vmem:[%s211 + $0x81] sm:$0xff]
        %v723 = vld [vmem:[%s211 + $0x91] sm:$0xff]
        %v724 = vld [vmem:[%s211 + $0x99] sm:$0xff]
        %v725 = vld [vmem:[%s211 + $0xa9] sm:$0xff]
        %v726 = vld [vmem:[%s211 + $0xb1] sm:$0xff]
        %v727 = vld [vmem:[%s211 + $0xc1] sm:$0xff]
        %v728 = vld [vmem:[%s211 + $0xc9] sm:$0xff]
        %v729 = vld [vmem:[%s211 + $0xd9] sm:$0xff]
        %v730 = vld [vmem:[%s211 + $0xe1] sm:$0xff]
        %v731 = vld [vmem:[%s211 + $0xf1] sm:$0xff]
        %v732 = vld [vmem:[%s211 + $0xf9] sm:$0xff]
        %v733 = vld [vmem:[%s211 + $0x109] sm:$0xff]
        %v734 = vld [vmem:[%s211 + $0x111] sm:$0xff]
        %v735 = vld [vmem:[%s211 + $0x121] sm:$0xff]
        %v736 = vld [vmem:[%s211 + $0x129] sm:$0xff]
        %v737 = vld [vmem:[%s211 + $0x139] sm:$0xff]
        %v738 = vld [vmem:[%s211 + $0x141] sm:$0xff]
        %v739 = vld [vmem:[%s211 + $0x151] sm:$0xff]
        %v740 = vld [vmem:[%s211 + $0x159] sm:$0xff]
        %v741 = vld [vmem:[%s211 + $0x169] sm:$0xff]
        %v742 = vld [vmem:[%s211 + $0x171] sm:$0xff]
        %v743 = vlaneseq
        %v744 = vshrl.u32 %v743, 7
        %v745 = vsub.s32 4, %v744
        %v746 = vrot.slane %v308, %v745
        %v747 = vmul.f32 %v711, %v746
        %v748 = vmul.f32 %v712, %v746
        %v749 = vmul.f32 %v713, %v746
        %v750 = vmul.f32 %v714, %v746
        %v751 = vmul.f32 %v715, %v746
        %v752 = vmul.f32 %v716, %v746
        %v753 = vmul.f32 %v717, %v746
        %v754 = vmul.f32 %v718, %v746
        %v755 = vmul.f32 %v719, %v746
        %v756 = vmul.f32 %v720, %v746
        %v757 = vmul.f32 %v721, %v746
        %v758 = vmul.f32 %v722, %v746
        %v759 = vmul.f32 %v723, %v746
        %v760 = vmul.f32 %v724, %v746
        %v761 = vmul.f32 %v725, %v746
        %v762 = vmul.f32 %v726, %v746
        %v763 = vmul.f32 %v727, %v746
        %v764 = vmul.f32 %v728, %v746
        %v765 = vmul.f32 %v729, %v746
        %v766 = vmul.f32 %v730, %v746
        %v767 = vmul.f32 %v731, %v746
        %v768 = vmul.f32 %v732, %v746
        %v769 = vmul.f32 %v733, %v746
        %v770 = vmul.f32 %v734, %v746
        %v771 = vmul.f32 %v735, %v746
        %v772 = vmul.f32 %v736, %v746
        %v773 = vmul.f32 %v737, %v746
        %v774 = vmul.f32 %v738, %v746
        %v775 = vmul.f32 %v739, %v746
        %v776 = vmul.f32 %v740, %v746
        %v777 = vmul.f32 %v741, %v746
        %v778 = vmul.f32 %v742, %v746
        %v779 = vadd.f32 %v679, %v747
        %v780 = vadd.f32 %v680, %v748
        %v781 = vadd.f32 %v681, %v749
        %v782 = vadd.f32 %v682, %v750
        %v783 = vadd.f32 %v683, %v751
        %v784 = vadd.f32 %v684, %v752
        %v785 = vadd.f32 %v685, %v753
        %v786 = vadd.f32 %v686, %v754
        %v787 = vadd.f32 %v687, %v755
        %v788 = vadd.f32 %v688, %v756
        %v789 = vadd.f32 %v689, %v757
        %v790 = vadd.f32 %v690, %v758
        %v791 = vadd.f32 %v691, %v759
        %v792 = vadd.f32 %v692, %v760
        %v793 = vadd.f32 %v693, %v761
        %v794 = vadd.f32 %v694, %v762
        %v795 = vadd.f32 %v695, %v763
        %v796 = vadd.f32 %v696, %v764
        %v797 = vadd.f32 %v697, %v765
        %v798 = vadd.f32 %v698, %v766
        %v799 = vadd.f32 %v699, %v767
        %v800 = vadd.f32 %v700, %v768
        %v801 = vadd.f32 %v701, %v769
        %v802 = vadd.f32 %v702, %v770
        %v803 = vadd.f32 %v703, %v771
        %v804 = vadd.f32 %v704, %v772
        %v805 = vadd.f32 %v705, %v773
        %v806 = vadd.f32 %v706, %v774
        %v807 = vadd.f32 %v707, %v775
        %v808 = vadd.f32 %v708, %v776
        %v809 = vadd.f32 %v709, %v777
        %v810 = vadd.f32 %v710, %v778
        %v811 = vld [vmem:[%s211 + $0x2] sm:$0xff]
        %v812 = vld [vmem:[%s211 + $0xa] sm:$0xff]
        %v813 = vld [vmem:[%s211 + $0x1a] sm:$0xff]
        %v814 = vld [vmem:[%s211 + $0x22] sm:$0xff]
        %v815 = vld [vmem:[%s211 + $0x32] sm:$0xff]
        %v816 = vld [vmem:[%s211 + $0x3a] sm:$0xff]
        %v817 = vld [vmem:[%s211 + $0x4a] sm:$0xff]
        %v818 = vld [vmem:[%s211 + $0x52] sm:$0xff]
        %v819 = vld [vmem:[%s211 + $0x62] sm:$0xff]
        %v820 = vld [vmem:[%s211 + $0x6a] sm:$0xff]
        %v821 = vld [vmem:[%s211 + $0x7a] sm:$0xff]
        %v822 = vld [vmem:[%s211 + $0x82] sm:$0xff]
        %v823 = vld [vmem:[%s211 + $0x92] sm:$0xff]
        %v824 = vld [vmem:[%s211 + $0x9a] sm:$0xff]
        %v825 = vld [vmem:[%s211 + $0xaa] sm:$0xff]
        %v826 = vld [vmem:[%s211 + $0xb2] sm:$0xff]
        %v827 = vld [vmem:[%s211 + $0xc2] sm:$0xff]
        %v828 = vld [vmem:[%s211 + $0xca] sm:$0xff]
        %v829 = vld [vmem:[%s211 + $0xda] sm:$0xff]
        %v830 = vld [vmem:[%s211 + $0xe2] sm:$0xff]
        %v831 = vld [vmem:[%s211 + $0xf2] sm:$0xff]
        %v832 = vld [vmem:[%s211 + $0xfa] sm:$0xff]
        %v833 = vld [vmem:[%s211 + $0x10a] sm:$0xff]
        %v834 = vld [vmem:[%s211 + $0x112] sm:$0xff]
        %v835 = vld [vmem:[%s211 + $0x122] sm:$0xff]
        %v836 = vld [vmem:[%s211 + $0x12a] sm:$0xff]
        %v837 = vld [vmem:[%s211 + $0x13a] sm:$0xff]
        %v838 = vld [vmem:[%s211 + $0x142] sm:$0xff]
        %v839 = vld [vmem:[%s211 + $0x152] sm:$0xff]
        %v840 = vld [vmem:[%s211 + $0x15a] sm:$0xff]
        %v841 = vld [vmem:[%s211 + $0x16a] sm:$0xff]
        %v842 = vld [vmem:[%s211 + $0x172] sm:$0xff]
        %v843 = vlaneseq
        %v844 = vshrl.u32 %v843, 7
        %v845 = vsub.s32 5, %v844
        %v846 = vrot.slane %v308, %v845
        %v847 = vmul.f32 %v811, %v846
        %v848 = vmul.f32 %v812, %v846
        %v849 = vmul.f32 %v813, %v846
        %v850 = vmul.f32 %v814, %v846
        %v851 = vmul.f32 %v815, %v846
        %v852 = vmul.f32 %v816, %v846
        %v853 = vmul.f32 %v817, %v846
        %v854 = vmul.f32 %v818, %v846
        %v855 = vmul.f32 %v819, %v846
        %v856 = vmul.f32 %v820, %v846
        %v857 = vmul.f32 %v821, %v846
        %v858 = vmul.f32 %v822, %v846
        %v859 = vmul.f32 %v823, %v846
        %v860 = vmul.f32 %v824, %v846
        %v861 = vmul.f32 %v825, %v846
        %v862 = vmul.f32 %v826, %v846
        %v863 = vmul.f32 %v827, %v846
        %v864 = vmul.f32 %v828, %v846
        %v865 = vmul.f32 %v829, %v846
        %v866 = vmul.f32 %v830, %v846
        %v867 = vmul.f32 %v831, %v846
        %v868 = vmul.f32 %v832, %v846
        %v869 = vmul.f32 %v833, %v846
        %v870 = vmul.f32 %v834, %v846
        %v871 = vmul.f32 %v835, %v846
        %v872 = vmul.f32 %v836, %v846
        %v873 = vmul.f32 %v837, %v846
        %v874 = vmul.f32 %v838, %v846
        %v875 = vmul.f32 %v839, %v846
        %v876 = vmul.f32 %v840, %v846
        %v877 = vmul.f32 %v841, %v846
        %v878 = vmul.f32 %v842, %v846
        %v879 = vadd.f32 %v779, %v847
        %v880 = vadd.f32 %v780, %v848
        %v881 = vadd.f32 %v781, %v849
        %v882 = vadd.f32 %v782, %v850
        %v883 = vadd.f32 %v783, %v851
        %v884 = vadd.f32 %v784, %v852
        %v885 = vadd.f32 %v785, %v853
        %v886 = vadd.f32 %v786, %v854
        %v887 = vadd.f32 %v787, %v855
        %v888 = vadd.f32 %v788, %v856
        %v889 = vadd.f32 %v789, %v857
        %v890 = vadd.f32 %v790, %v858
        %v891 = vadd.f32 %v791, %v859
        %v892 = vadd.f32 %v792, %v860
        %v893 = vadd.f32 %v793, %v861
        %v894 = vadd.f32 %v794, %v862
        %v895 = vadd.f32 %v795, %v863
        %v896 = vadd.f32 %v796, %v864
        %v897 = vadd.f32 %v797, %v865
        %v898 = vadd.f32 %v798, %v866
        %v899 = vadd.f32 %v799, %v867
        %v900 = vadd.f32 %v800, %v868
        %v901 = vadd.f32 %v801, %v869
        %v902 = vadd.f32 %v802, %v870
        %v903 = vadd.f32 %v803, %v871
        %v904 = vadd.f32 %v804, %v872
        %v905 = vadd.f32 %v805, %v873
        %v906 = vadd.f32 %v806, %v874
        %v907 = vadd.f32 %v807, %v875
        %v908 = vadd.f32 %v808, %v876
        %v909 = vadd.f32 %v809, %v877
        %v910 = vadd.f32 %v810, %v878
        %s911 = scalar_lea.vmem [#allocation2], 48
        %v912 = vld [vmem:[%s911] sm:$0xff]
        %v913 = vld [vmem:[%s911 + $0x8] sm:$0xff]
        %v914 = vld [vmem:[%s911 + $0x18] sm:$0xff]
        %v915 = vld [vmem:[%s911 + $0x20] sm:$0xff]
        %v916 = vld [vmem:[%s911 + $0x30] sm:$0xff]
        %v917 = vld [vmem:[%s911 + $0x38] sm:$0xff]
        %v918 = vld [vmem:[%s911 + $0x48] sm:$0xff]
        %v919 = vld [vmem:[%s911 + $0x50] sm:$0xff]
        %v920 = vld [vmem:[%s911 + $0x60] sm:$0xff]
        %v921 = vld [vmem:[%s911 + $0x68] sm:$0xff]
        %v922 = vld [vmem:[%s911 + $0x78] sm:$0xff]
        %v923 = vld [vmem:[%s911 + $0x80] sm:$0xff]
        %v924 = vld [vmem:[%s911 + $0x90] sm:$0xff]
        %v925 = vld [vmem:[%s911 + $0x98] sm:$0xff]
        %v926 = vld [vmem:[%s911 + $0xa8] sm:$0xff]
        %v927 = vld [vmem:[%s911 + $0xb0] sm:$0xff]
        %v928 = vld [vmem:[%s911 + $0xc0] sm:$0xff]
        %v929 = vld [vmem:[%s911 + $0xc8] sm:$0xff]
        %v930 = vld [vmem:[%s911 + $0xd8] sm:$0xff]
        %v931 = vld [vmem:[%s911 + $0xe0] sm:$0xff]
        %v932 = vld [vmem:[%s911 + $0xf0] sm:$0xff]
        %v933 = vld [vmem:[%s911 + $0xf8] sm:$0xff]
        %v934 = vld [vmem:[%s911 + $0x108] sm:$0xff]
        %v935 = vld [vmem:[%s911 + $0x110] sm:$0xff]
        %v936 = vld [vmem:[%s911 + $0x120] sm:$0xff]
        %v937 = vld [vmem:[%s911 + $0x128] sm:$0xff]
        %v938 = vld [vmem:[%s911 + $0x138] sm:$0xff]
        %v939 = vld [vmem:[%s911 + $0x140] sm:$0xff]
        %v940 = vld [vmem:[%s911 + $0x150] sm:$0xff]
        %v941 = vld [vmem:[%s911 + $0x158] sm:$0xff]
        %v942 = vld [vmem:[%s911 + $0x168] sm:$0xff]
        %v943 = vld [vmem:[%s911 + $0x170] sm:$0xff]
        %v944 = vlaneseq
        %v945 = vshrl.u32 %v944, 7
        %v946 = vsub.s32 6, %v945
        %v947 = vrot.slane %v308, %v946
        %v948 = vmul.f32 %v912, %v947
        %v949 = vmul.f32 %v913, %v947
        %v950 = vmul.f32 %v914, %v947
        %v951 = vmul.f32 %v915, %v947
        %v952 = vmul.f32 %v916, %v947
        %v953 = vmul.f32 %v917, %v947
        %v954 = vmul.f32 %v918, %v947
        %v955 = vmul.f32 %v919, %v947
        %v956 = vmul.f32 %v920, %v947
        %v957 = vmul.f32 %v921, %v947
        %v958 = vmul.f32 %v922, %v947
        %v959 = vmul.f32 %v923, %v947
        %v960 = vmul.f32 %v924, %v947
        %v961 = vmul.f32 %v925, %v947
        %v962 = vmul.f32 %v926, %v947
        %v963 = vmul.f32 %v927, %v947
        %v964 = vmul.f32 %v928, %v947
        %v965 = vmul.f32 %v929, %v947
        %v966 = vmul.f32 %v930, %v947
        %v967 = vmul.f32 %v931, %v947
        %v968 = vmul.f32 %v932, %v947
        %v969 = vmul.f32 %v933, %v947
        %v970 = vmul.f32 %v934, %v947
        %v971 = vmul.f32 %v935, %v947
        %v972 = vmul.f32 %v936, %v947
        %v973 = vmul.f32 %v937, %v947
        %v974 = vmul.f32 %v938, %v947
        %v975 = vmul.f32 %v939, %v947
        %v976 = vmul.f32 %v940, %v947
        %v977 = vmul.f32 %v941, %v947
        %v978 = vmul.f32 %v942, %v947
        %v979 = vmul.f32 %v943, %v947
        %v980 = vadd.f32 %v879, %v948
        %v981 = vadd.f32 %v880, %v949
        %v982 = vadd.f32 %v881, %v950
        %v983 = vadd.f32 %v882, %v951
        %v984 = vadd.f32 %v883, %v952
        %v985 = vadd.f32 %v884, %v953
        %v986 = vadd.f32 %v885, %v954
        %v987 = vadd.f32 %v886, %v955
        %v988 = vadd.f32 %v887, %v956
        %v989 = vadd.f32 %v888, %v957
        %v990 = vadd.f32 %v889, %v958
        %v991 = vadd.f32 %v890, %v959
        %v992 = vadd.f32 %v891, %v960
        %v993 = vadd.f32 %v892, %v961
        %v994 = vadd.f32 %v893, %v962
        %v995 = vadd.f32 %v894, %v963
        %v996 = vadd.f32 %v895, %v964
        %v997 = vadd.f32 %v896, %v965
        %v998 = vadd.f32 %v897, %v966
        %v999 = vadd.f32 %v898, %v967
        %v1000 = vadd.f32 %v899, %v968
        %v1001 = vadd.f32 %v900, %v969
        %v1002 = vadd.f32 %v901, %v970
        %v1003 = vadd.f32 %v902, %v971
        %v1004 = vadd.f32 %v903, %v972
        %v1005 = vadd.f32 %v904, %v973
        %v1006 = vadd.f32 %v905, %v974
        %v1007 = vadd.f32 %v906, %v975
        %v1008 = vadd.f32 %v907, %v976
        %v1009 = vadd.f32 %v908, %v977
        %v1010 = vadd.f32 %v909, %v978
        %v1011 = vadd.f32 %v910, %v979
        %v1012 = vld [vmem:[%s911 + $0x1] sm:$0xff]
        %v1013 = vld [vmem:[%s911 + $0x9] sm:$0xff]
        %v1014 = vld [vmem:[%s911 + $0x19] sm:$0xff]
        %v1015 = vld [vmem:[%s911 + $0x21] sm:$0xff]
        %v1016 = vld [vmem:[%s911 + $0x31] sm:$0xff]
        %v1017 = vld [vmem:[%s911 + $0x39] sm:$0xff]
        %v1018 = vld [vmem:[%s911 + $0x49] sm:$0xff]
        %v1019 = vld [vmem:[%s911 + $0x51] sm:$0xff]
        %v1020 = vld [vmem:[%s911 + $0x61] sm:$0xff]
        %v1021 = vld [vmem:[%s911 + $0x69] sm:$0xff]
        %v1022 = vld [vmem:[%s911 + $0x79] sm:$0xff]
        %v1023 = vld [vmem:[%s911 + $0x81] sm:$0xff]
        %v1024 = vld [vmem:[%s911 + $0x91] sm:$0xff]
        %v1025 = vld [vmem:[%s911 + $0x99] sm:$0xff]
        %v1026 = vld [vmem:[%s911 + $0xa9] sm:$0xff]
        %v1027 = vld [vmem:[%s911 + $0xb1] sm:$0xff]
        %v1028 = vld [vmem:[%s911 + $0xc1] sm:$0xff]
        %v1029 = vld [vmem:[%s911 + $0xc9] sm:$0xff]
        %v1030 = vld [vmem:[%s911 + $0xd9] sm:$0xff]
        %v1031 = vld [vmem:[%s911 + $0xe1] sm:$0xff]
        %v1032 = vld [vmem:[%s911 + $0xf1] sm:$0xff]
        %v1033 = vld [vmem:[%s911 + $0xf9] sm:$0xff]
        %v1034 = vld [vmem:[%s911 + $0x109] sm:$0xff]
        %v1035 = vld [vmem:[%s911 + $0x111] sm:$0xff]
        %v1036 = vld [vmem:[%s911 + $0x121] sm:$0xff]
        %v1037 = vld [vmem:[%s911 + $0x129] sm:$0xff]
        %v1038 = vld [vmem:[%s911 + $0x139] sm:$0xff]
        %v1039 = vld [vmem:[%s911 + $0x141] sm:$0xff]
        %v1040 = vld [vmem:[%s911 + $0x151] sm:$0xff]
        %v1041 = vld [vmem:[%s911 + $0x159] sm:$0xff]
        %v1042 = vld [vmem:[%s911 + $0x169] sm:$0xff]
        %v1043 = vld [vmem:[%s911 + $0x171] sm:$0xff]
        %v1044 = vlaneseq
        %v1045 = vshrl.u32 %v1044, 7
        %v1046 = vsub.s32 7, %v1045
        %v1047 = vrot.slane %v308, %v1046
        %v1048 = vmul.f32 %v1012, %v1047
        %v1049 = vmul.f32 %v1013, %v1047
        %v1050 = vmul.f32 %v1014, %v1047
        %v1051 = vmul.f32 %v1015, %v1047
        %v1052 = vmul.f32 %v1016, %v1047
        %v1053 = vmul.f32 %v1017, %v1047
        %v1054 = vmul.f32 %v1018, %v1047
        %v1055 = vmul.f32 %v1019, %v1047
        %v1056 = vmul.f32 %v1020, %v1047
        %v1057 = vmul.f32 %v1021, %v1047
        %v1058 = vmul.f32 %v1022, %v1047
        %v1059 = vmul.f32 %v1023, %v1047
        %v1060 = vmul.f32 %v1024, %v1047
        %v1061 = vmul.f32 %v1025, %v1047
        %v1062 = vmul.f32 %v1026, %v1047
        %v1063 = vmul.f32 %v1027, %v1047
        %v1064 = vmul.f32 %v1028, %v1047
        %v1065 = vmul.f32 %v1029, %v1047
        %v1066 = vmul.f32 %v1030, %v1047
        %v1067 = vmul.f32 %v1031, %v1047
        %v1068 = vmul.f32 %v1032, %v1047
        %v1069 = vmul.f32 %v1033, %v1047
        %v1070 = vmul.f32 %v1034, %v1047
        %v1071 = vmul.f32 %v1035, %v1047
        %v1072 = vmul.f32 %v1036, %v1047
        %v1073 = vmul.f32 %v1037, %v1047
        %v1074 = vmul.f32 %v1038, %v1047
        %v1075 = vmul.f32 %v1039, %v1047
        %v1076 = vmul.f32 %v1040, %v1047
        %v1077 = vmul.f32 %v1041, %v1047
        %v1078 = vmul.f32 %v1042, %v1047
        %v1079 = vmul.f32 %v1043, %v1047
        %v1080 = vadd.f32 %v980, %v1048
        %v1081 = vadd.f32 %v981, %v1049
        %v1082 = vadd.f32 %v982, %v1050
        %v1083 = vadd.f32 %v983, %v1051
        %v1084 = vadd.f32 %v984, %v1052
        %v1085 = vadd.f32 %v985, %v1053
        %v1086 = vadd.f32 %v986, %v1054
        %v1087 = vadd.f32 %v987, %v1055
        %v1088 = vadd.f32 %v988, %v1056
        %v1089 = vadd.f32 %v989, %v1057
        %v1090 = vadd.f32 %v990, %v1058
        %v1091 = vadd.f32 %v991, %v1059
        %v1092 = vadd.f32 %v992, %v1060
        %v1093 = vadd.f32 %v993, %v1061
        %v1094 = vadd.f32 %v994, %v1062
        %v1095 = vadd.f32 %v995, %v1063
        %v1096 = vadd.f32 %v996, %v1064
        %v1097 = vadd.f32 %v997, %v1065
        %v1098 = vadd.f32 %v998, %v1066
        %v1099 = vadd.f32 %v999, %v1067
        %v1100 = vadd.f32 %v1000, %v1068
        %v1101 = vadd.f32 %v1001, %v1069
        %v1102 = vadd.f32 %v1002, %v1070
        %v1103 = vadd.f32 %v1003, %v1071
        %v1104 = vadd.f32 %v1004, %v1072
        %v1105 = vadd.f32 %v1005, %v1073
        %v1106 = vadd.f32 %v1006, %v1074
        %v1107 = vadd.f32 %v1007, %v1075
        %v1108 = vadd.f32 %v1008, %v1076
        %v1109 = vadd.f32 %v1009, %v1077
        %v1110 = vadd.f32 %v1010, %v1078
        %v1111 = vadd.f32 %v1011, %v1079
        %v1112 = vld [vmem:[%s911 + $0x2] sm:$0xff]
        %v1113 = vld [vmem:[%s911 + $0xa] sm:$0xff]
        %v1114 = vld [vmem:[%s911 + $0x1a] sm:$0xff]
        %v1115 = vld [vmem:[%s911 + $0x22] sm:$0xff]
        %v1116 = vld [vmem:[%s911 + $0x32] sm:$0xff]
        %v1117 = vld [vmem:[%s911 + $0x3a] sm:$0xff]
        %v1118 = vld [vmem:[%s911 + $0x4a] sm:$0xff]
        %v1119 = vld [vmem:[%s911 + $0x52] sm:$0xff]
        %v1120 = vld [vmem:[%s911 + $0x62] sm:$0xff]
        %v1121 = vld [vmem:[%s911 + $0x6a] sm:$0xff]
        %v1122 = vld [vmem:[%s911 + $0x7a] sm:$0xff]
        %v1123 = vld [vmem:[%s911 + $0x82] sm:$0xff]
        %v1124 = vld [vmem:[%s911 + $0x92] sm:$0xff]
        %v1125 = vld [vmem:[%s911 + $0x9a] sm:$0xff]
        %v1126 = vld [vmem:[%s911 + $0xaa] sm:$0xff]
        %v1127 = vld [vmem:[%s911 + $0xb2] sm:$0xff]
        %v1128 = vld [vmem:[%s911 + $0xc2] sm:$0xff]
        %v1129 = vld [vmem:[%s911 + $0xca] sm:$0xff]
        %v1130 = vld [vmem:[%s911 + $0xda] sm:$0xff]
        %v1131 = vld [vmem:[%s911 + $0xe2] sm:$0xff]
        %v1132 = vld [vmem:[%s911 + $0xf2] sm:$0xff]
        %v1133 = vld [vmem:[%s911 + $0xfa] sm:$0xff]
        %v1134 = vld [vmem:[%s911 + $0x10a] sm:$0xff]
        %v1135 = vld [vmem:[%s911 + $0x112] sm:$0xff]
        %v1136 = vld [vmem:[%s911 + $0x122] sm:$0xff]
        %v1137 = vld [vmem:[%s911 + $0x12a] sm:$0xff]
        %v1138 = vld [vmem:[%s911 + $0x13a] sm:$0xff]
        %v1139 = vld [vmem:[%s911 + $0x142] sm:$0xff]
        %v1140 = vld [vmem:[%s911 + $0x152] sm:$0xff]
        %v1141 = vld [vmem:[%s911 + $0x15a] sm:$0xff]
        %v1142 = vld [vmem:[%s911 + $0x16a] sm:$0xff]
        %v1143 = vld [vmem:[%s911 + $0x172] sm:$0xff]
        %v1144 = vlaneseq
        %v1145 = vshrl.u32 %v1144, 7
        %v1146 = vsub.s32 0, %v1145
        %v1147 = vrot.slane %v309, %v1146
        %v1148 = vmul.f32 %v1112, %v1147
        %v1149 = vmul.f32 %v1113, %v1147
        %v1150 = vmul.f32 %v1114, %v1147
        %v1151 = vmul.f32 %v1115, %v1147
        %v1152 = vmul.f32 %v1116, %v1147
        %v1153 = vmul.f32 %v1117, %v1147
        %v1154 = vmul.f32 %v1118, %v1147
        %v1155 = vmul.f32 %v1119, %v1147
        %v1156 = vmul.f32 %v1120, %v1147
        %v1157 = vmul.f32 %v1121, %v1147
        %v1158 = vmul.f32 %v1122, %v1147
        %v1159 = vmul.f32 %v1123, %v1147
        %v1160 = vmul.f32 %v1124, %v1147
        %v1161 = vmul.f32 %v1125, %v1147
        %v1162 = vmul.f32 %v1126, %v1147
        %v1163 = vmul.f32 %v1127, %v1147
        %v1164 = vmul.f32 %v1128, %v1147
        %v1165 = vmul.f32 %v1129, %v1147
        %v1166 = vmul.f32 %v1130, %v1147
        %v1167 = vmul.f32 %v1131, %v1147
        %v1168 = vmul.f32 %v1132, %v1147
        %v1169 = vmul.f32 %v1133, %v1147
        %v1170 = vmul.f32 %v1134, %v1147
        %v1171 = vmul.f32 %v1135, %v1147
        %v1172 = vmul.f32 %v1136, %v1147
        %v1173 = vmul.f32 %v1137, %v1147
        %v1174 = vmul.f32 %v1138, %v1147
        %v1175 = vmul.f32 %v1139, %v1147
        %v1176 = vmul.f32 %v1140, %v1147
        %v1177 = vmul.f32 %v1141, %v1147
        %v1178 = vmul.f32 %v1142, %v1147
        %v1179 = vmul.f32 %v1143, %v1147
        %v1180 = vadd.f32 %v1080, %v1148
        %v1181 = vadd.f32 %v1081, %v1149
        %v1182 = vadd.f32 %v1082, %v1150
        %v1183 = vadd.f32 %v1083, %v1151
        %v1184 = vadd.f32 %v1084, %v1152
        %v1185 = vadd.f32 %v1085, %v1153
        %v1186 = vadd.f32 %v1086, %v1154
        %v1187 = vadd.f32 %v1087, %v1155
        %v1188 = vadd.f32 %v1088, %v1156
        %v1189 = vadd.f32 %v1089, %v1157
        %v1190 = vadd.f32 %v1090, %v1158
        %v1191 = vadd.f32 %v1091, %v1159
        %v1192 = vadd.f32 %v1092, %v1160
        %v1193 = vadd.f32 %v1093, %v1161
        %v1194 = vadd.f32 %v1094, %v1162
        %v1195 = vadd.f32 %v1095, %v1163
        %v1196 = vadd.f32 %v1096, %v1164
        %v1197 = vadd.f32 %v1097, %v1165
        %v1198 = vadd.f32 %v1098, %v1166
        %v1199 = vadd.f32 %v1099, %v1167
        %v1200 = vadd.f32 %v1100, %v1168
        %v1201 = vadd.f32 %v1101, %v1169
        %v1202 = vadd.f32 %v1102, %v1170
        %v1203 = vadd.f32 %v1103, %v1171
        %v1204 = vadd.f32 %v1104, %v1172
        %v1205 = vadd.f32 %v1105, %v1173
        %v1206 = vadd.f32 %v1106, %v1174
        %v1207 = vadd.f32 %v1107, %v1175
        %v1208 = vadd.f32 %v1108, %v1176
        %v1209 = vadd.f32 %v1109, %v1177
        %v1210 = vadd.f32 %v1110, %v1178
        %v1211 = vadd.f32 %v1111, %v1179
        %v1213 = vlaneseq
        %v1214 = vshrl.u32 %v1213, 7
        %v1215 = vsub.s32 0, %v1214
        %v1216 = vrot.slane %v310, %v1215
        %v1218 = vadd.f32 %v1180, %v1216
        %v1219 = vadd.f32 %v1181, %v1216
        %v1220 = vadd.f32 %v1182, %v1216
        %v1221 = vadd.f32 %v1183, %v1216
        %v1222 = vadd.f32 %v1184, %v1216
        %v1223 = vadd.f32 %v1185, %v1216
        %v1224 = vadd.f32 %v1186, %v1216
        %v1225 = vadd.f32 %v1187, %v1216
        %v1226 = vadd.f32 %v1188, %v1216
        %v1227 = vadd.f32 %v1189, %v1216
        %v1228 = vadd.f32 %v1190, %v1216
        %v1229 = vadd.f32 %v1191, %v1216
        %v1230 = vadd.f32 %v1192, %v1216
        %v1231 = vadd.f32 %v1193, %v1216
        %v1232 = vadd.f32 %v1194, %v1216
        %v1233 = vadd.f32 %v1195, %v1216
        %v1234 = vadd.f32 %v1196, %v1216
        %v1235 = vadd.f32 %v1197, %v1216
        %v1236 = vadd.f32 %v1198, %v1216
        %v1237 = vadd.f32 %v1199, %v1216
        %v1238 = vadd.f32 %v1200, %v1216
        %v1239 = vadd.f32 %v1201, %v1216
        %v1240 = vadd.f32 %v1202, %v1216
        %v1241 = vadd.f32 %v1203, %v1216
        %v1242 = vadd.f32 %v1204, %v1216
        %v1243 = vadd.f32 %v1205, %v1216
        %v1244 = vadd.f32 %v1206, %v1216
        %v1245 = vadd.f32 %v1207, %v1216
        %v1246 = vadd.f32 %v1208, %v1216
        %v1247 = vadd.f32 %v1209, %v1216
        %v1248 = vadd.f32 %v1210, %v1216
        %v1249 = vadd.f32 %v1211, %v1216
        %1250 = vst [vmem:[%s203] sm:$0xff] %v1218
        %1251 = vst [vmem:[%s203 + $0x8] sm:$0xff] %v1219
        %1252 = vst [vmem:[%s203 + $0x10] sm:$0xff] %v1220
        %1253 = vst [vmem:[%s203 + $0x18] sm:$0xff] %v1221
        %1254 = vst [vmem:[%s203 + $0x20] sm:$0xff] %v1222
        %1255 = vst [vmem:[%s203 + $0x28] sm:$0xff] %v1223
        %1256 = vst [vmem:[%s203 + $0x30] sm:$0xff] %v1224
        %1257 = vst [vmem:[%s203 + $0x38] sm:$0xff] %v1225
        %1258 = vst [vmem:[%s203 + $0x40] sm:$0xff] %v1226
        %1259 = vst [vmem:[%s203 + $0x48] sm:$0xff] %v1227
        %1260 = vst [vmem:[%s203 + $0x50] sm:$0xff] %v1228
        %1261 = vst [vmem:[%s203 + $0x58] sm:$0xff] %v1229
        %1262 = vst [vmem:[%s203 + $0x60] sm:$0xff] %v1230
        %1263 = vst [vmem:[%s203 + $0x68] sm:$0xff] %v1231
        %1264 = vst [vmem:[%s203 + $0x70] sm:$0xff] %v1232
        %1265 = vst [vmem:[%s203 + $0x78] sm:$0xff] %v1233
        %1266 = vst [vmem:[%s203 + $0x80] sm:$0xff] %v1234
        %1267 = vst [vmem:[%s203 + $0x88] sm:$0xff] %v1235
        %1268 = vst [vmem:[%s203 + $0x90] sm:$0xff] %v1236
        %1269 = vst [vmem:[%s203 + $0x98] sm:$0xff] %v1237
        %1270 = vst [vmem:[%s203 + $0xa0] sm:$0xff] %v1238
        %1271 = vst [vmem:[%s203 + $0xa8] sm:$0xff] %v1239
        %1272 = vst [vmem:[%s203 + $0xb0] sm:$0xff] %v1240
        %1273 = vst [vmem:[%s203 + $0xb8] sm:$0xff] %v1241
        %1274 = vst [vmem:[%s203 + $0xc0] sm:$0xff] %v1242
        %1275 = vst [vmem:[%s203 + $0xc8] sm:$0xff] %v1243
        %1276 = vst [vmem:[%s203 + $0xd0] sm:$0xff] %v1244
        %1277 = vst [vmem:[%s203 + $0xd8] sm:$0xff] %v1245
        %1278 = vst [vmem:[%s203 + $0xe0] sm:$0xff] %v1246
        %1279 = vst [vmem:[%s203 + $0xe8] sm:$0xff] %v1247
        %1280 = vst [vmem:[%s203 + $0xf0] sm:$0xff] %v1248
        %1281 = vst [vmem:[%s203 + $0xf8] sm:$0xff] %v1249
        %s1282 = sand.u32 %s97, 1
        %s1283 = scalar_lea.sflag [#allocation5], %s1282
        %s1284 = sand.u32 %s97, 1
        %s1285 = smul.addr %s1284, 256
        %s1286 = scalar_lea.vmem [#allocation8], %s1285
        // Predicated region
        $region41: #{tpu_custom_call.1} parent=31 // pred_check
          %p1287 = pneg %p107
        $region42: #{tpu_custom_call.1} parent=31 // pred_check_branch
          %1289 = sbr.rel (%p1287) target = $region44
        $region43: #{tpu_custom_call.1} parent=31 // pred_region
          %s1291 = ssub.s32 4096, 4096
          %1292 = vsyncadd %s1283, %s1291
          %s1293 = smul.addr %s21, 32
          %s1294 = smul.addr %s1293, 128
          %s1295 = scalar_lea.hbm %s3, %s1294
          %s1296 = sshll.u32 %s1286, 4
          %s1297 = int_to_ptr.vmem [resolvable:$true] %s1296
          %1302 = dma.vmem_to_hbm [thread:$0]  %s1297, 4096, %s1295, %s1283, 128, 128, 8
        $region44: #{tpu_custom_call.1} parent=31 // pred_fallthru
          _
      $region32: #{tpu_custom_call.1} parent=5 // pred_fallthru
        _
      %p1303 = scmp.le.s32.totalorder 2, %s16
      // Predicated region
      $region45: #{tpu_custom_call.1} parent=5 // pred_check
        %p1304 = pneg %p1303
      $region46: #{tpu_custom_call.1} parent=5 // pred_check_branch
        %1306 = sbr.rel (%p1304) target = $region48
      $region47: #{tpu_custom_call.1} parent=5 // pred_region
        %s1307 = ssub.s32 %s16, 2
        // Predicated region
        $region49: #{tpu_custom_call.1} parent=47 // pred_check
          %p1308 = pneg %p113
        $region50: #{tpu_custom_call.1} parent=47 // pred_check_branch
          %1310 = sbr.rel (%p1308) target = $region52
        $region51: #{tpu_custom_call.1} parent=47 // pred_region
          %s1311 = sand.u32 %s98, 1
          %s1312 = scalar_lea.sflag [#allocation5], %s1311
          %s1313 = sand.u32 %s98, 1
          %s1314 = smul.addr %s1313, 256
          %s1315 = scalar_lea.vmem [#allocation8], %s1314
          %1316 = dma.done %s1312, 4096
        $region52: #{tpu_custom_call.1} parent=47 // pred_fallthru
          _
      $region48: #{tpu_custom_call.1} parent=5 // pred_fallthru
        _
    $region6: #{tpu_custom_call.1} parent=1 // loop_footer
      %s20 = sadd.s32 1, %s16
    $region7: #{tpu_custom_call.1} parent=1 // loop_footer_branch
      %15 = sbr.rel target = $region3
    $region8: #{tpu_custom_call.1} parent=1 // loop_exit
      _
    %1317 = vsyncpa [#allocation4], 1
    %s1318 = scalar_lea.sflag [#allocation4], 1
    %1319 = vsyncpa %s1318, 1
    %1320 = vsyncpa [#allocation7], 1
    %1321 = vsyncpa [#allocation5], 1
    %s1322 = scalar_lea.sflag [#allocation5], 1
    %1323 = vsyncpa %s1322, 1

</llo_original>
